<compile_context>
chip_gen: v6e
topology: v6e:2x2x1
jax: 0.10.0
libtpu: 0.0.40
codegen_flags: <defaults>
</compile_context>

<pallas_src>
import functools

import jax
import jax.numpy as jnp
from jax import lax
from jax.experimental import pallas as pl
from jax.experimental.pallas import tpu as pltpu


def _decoder_kernel(z_ref, wih_ref, whh_ref, b_ref, wfc_ref, bfc_ref,
                    out_ref, hid_ref,
                    *, seq_len, hidden_size, input_size, use_act):
    T, H, I = seq_len, hidden_size, input_size
    B = z_ref.shape[0]

    # ---- Phase 1: hoisted input projection for ALL timesteps (one MXU op) --
    # (B*T, H) @ (H, 4H) + (b_ih + b_hh).  Kept as a value: no VMEM round-trip.
    z_flat = z_ref[...].reshape(B * T, H)
    xw = jnp.dot(z_flat, wih_ref[...],
                 preferred_element_type=jnp.float32) + b_ref[...]
    xw = xw.reshape(B, T, 4 * H)

    w_hh = whh_ref[...]          # (H, 4H), loaded once
    w_fc = wfc_ref[...]          # (H, I)
    b_fc = bfc_ref[...]          # (1, I)

    # ---- Phase 2: recurrence.  h / c stay in vregs; static full unroll ------
    h = jnp.zeros((B, H), jnp.float32)
    c = jnp.zeros((B, H), jnp.float32)
    y_parts = []
    for t in range(T):
        x_t = xw[:, t, :]                                   # static slice
        gates = x_t + jnp.dot(h, w_hh, preferred_element_type=jnp.float32)
        # Gate axis is packed [i, f, o, g]: one sigmoid pass over 3H lanes,
        # one tanh pass over H lanes (instead of 4 separate EUP passes).
        s = jax.nn.sigmoid(gates[:, :3 * H])
        i_g = s[:, 0 * H:1 * H]
        f_g = s[:, 1 * H:2 * H]
        o_g = s[:, 2 * H:3 * H]
        g_g = jnp.tanh(gates[:, 3 * H:4 * H])
        c = f_g * c + i_g * g_g
        h = o_g * jnp.tanh(c)
        # Per-step fc is off the h->h serial chain; pieces are lane-
        # concatenated below so the output store is one lane-dense slab.
        y_parts.append(jnp.dot(h, w_fc, preferred_element_type=jnp.float32)
                       + b_fc)

    # ---- Phase 3: assemble lane-dense output + optional sigmoid ------------
    y = jnp.concatenate(y_parts, axis=-1)                   # (B, T*I)
    if use_act:
        y = jax.nn.sigmoid(y)                               # one EUP pass
    out_ref[...] = y.astype(out_ref.dtype)
    hid_ref[...] = h.astype(hid_ref.dtype)                  # written once


def decoder_forward(z, params, *, use_act=True):
    """z: (B, T, H) float32.  Returns (dec_out (B, T, I), hidden (1, B, H))."""
    B, T, H = z.shape
    w_ih_t = params["w_ih_t"]   # (H, 4H)  gate order [i, f, o, g]
    w_hh_t = params["w_hh_t"]   # (H, 4H)
    b_gate = params["b_gate"]   # (1, 4H)  (= b_ih + b_hh, reordered)
    w_fc_t = params["w_fc_t"]   # (H, I)
    b_fc = params["b_fc"]       # (1, I)
    I = w_fc_t.shape[1]

    kernel = functools.partial(
        _decoder_kernel, seq_len=T, hidden_size=H, input_size=I,
        use_act=use_act)

    vmem = pl.BlockSpec(memory_space=pltpu.MemorySpace.VMEM)
    out_flat, hid = pl.pallas_call(
        kernel,
        out_shape=(
            jax.ShapeDtypeStruct((B, T * I), z.dtype),      # lane-dense slab
            jax.ShapeDtypeStruct((B, H), z.dtype),
        ),
        in_specs=[vmem] * 6,
        out_specs=(vmem, vmem),
    )(z, w_ih_t, w_hh_t, b_gate, w_fc_t, b_fc)

    dec_out = out_flat.reshape(B, T, I)       # metadata-only; no transpose
    hidden_state = hid[None, :, :]            # (1, B, H)
    return dec_out, hidden_state


def init_torch_params(key, input_size, hidden_size):
    """PyTorch-layout parameters, U(-1/sqrt(H), 1/sqrt(H)), gates [i,f,g,o]."""
    H, I = hidden_size, input_size
    k = 1.0 / jnp.sqrt(jnp.float32(H))
    ks = jax.random.split(key, 6)
    return {
        "w_ih": jax.random.uniform(ks[0], (4 * H, H), jnp.float32, -k, k),
        "w_hh": jax.random.uniform(ks[1], (4 * H, H), jnp.float32, -k, k),
        "b_ih": jax.random.uniform(ks[2], (4 * H,), jnp.float32, -k, k),
        "b_hh": jax.random.uniform(ks[3], (4 * H,), jnp.float32, -k, k),
        "w_fc": jax.random.uniform(ks[4], (I, H), jnp.float32, -k, k),
        "b_fc": jax.random.uniform(ks[5], (I,), jnp.float32, -k, k),
    }


def prepare_params(tp, hidden_size):
    """One-time repack to the kernel layout.

    PyTorch packs the 4H gate axis as [i, f, g, o]; the kernel wants
    [i, f, o, g] so a single sigmoid covers a contiguous 3H slice and a single
    tanh covers the remaining H.
    """
    del hidden_size  # gate blocks are derived by splitting the 4H axis

    def reorder(v4h):   # [i, f, g, o] -> [i, f, o, g] along axis 0
        i, f, g, o = jnp.split(v4h, 4, axis=0)
        return jnp.concatenate([i, f, o, g], axis=0)

    w_ih = reorder(tp["w_ih"])
    w_hh = reorder(tp["w_hh"])
    b = reorder(tp["b_ih"] + tp["b_hh"])
    return {
        "w_ih_t": w_ih.T,                 # (H, 4H)
        "w_hh_t": w_hh.T,                 # (H, 4H)
        "b_gate": b[None, :],             # (1, 4H)
        "w_fc_t": tp["w_fc"].T,           # (H, I)
        "b_fc": tp["b_fc"][None, :],      # (1, I)
    }


def decoder_reference(z, tp, *, use_act=True):
    """Pure-JAX reference with PyTorch gate packing [i, f, g, o] (lax.scan)."""
    B, T, H = z.shape
    w_ih_t = tp["w_ih"].T
    w_hh_t = tp["w_hh"].T
    b = (tp["b_ih"] + tp["b_hh"])[None, :]
    w_fc_t = tp["w_fc"].T
    b_fc = tp["b_fc"][None, :]

    def step(carry, x_t):
        h, c = carry
        gates = x_t @ w_ih_t + h @ w_hh_t + b
        i = jax.nn.sigmoid(gates[:, 0 * H:1 * H])
        f = jax.nn.sigmoid(gates[:, 1 * H:2 * H])
        g = jnp.tanh(gates[:, 2 * H:3 * H])
        o = jax.nn.sigmoid(gates[:, 3 * H:4 * H])
        c_new = f * c + i * g
        h_new = o * jnp.tanh(c_new)
        return (h_new, c_new), h_new

    h0 = jnp.zeros((B, H), jnp.float32)
    c0 = jnp.zeros((B, H), jnp.float32)
    (h_last, _), hs = lax.scan(step, (h0, c0), jnp.transpose(z, (1, 0, 2)))
    dec_out = jnp.transpose(hs, (1, 0, 2)) @ w_fc_t + b_fc
    if use_act:
        dec_out = jax.nn.sigmoid(dec_out)
    return dec_out, h_last[None, :, :]


if __name__ == "__main__":
    # Small shapes consistent with the module: Decoder(input_size=16, hidden=32)
    input_size, hidden_size = 16, 32
    batch, seq = 2, 8
    use_act = True

    key = jax.random.PRNGKey(0)
    pkey, zkey = jax.random.split(key)
    torch_params = init_torch_params(pkey, input_size, hidden_size)
    kernel_params = prepare_params(torch_params, hidden_size)
    z = jax.random.normal(zkey, (batch, seq, hidden_size), jnp.float32)

    dec_out, hidden_state = decoder_forward(z, kernel_params, use_act=use_act)
    dec_out = jax.block_until_ready(dec_out)
    hidden_state = jax.block_until_ready(hidden_state)

    ref_out, ref_hidden = decoder_reference(z, torch_params, use_act=use_act)
    assert dec_out.shape == (batch, seq, input_size)
    assert hidden_state.shape == (1, batch, hidden_size)
    assert jnp.allclose(dec_out, ref_out, atol=1e-5, rtol=1e-5)
    assert jnp.allclose(hidden_state, ref_hidden, atol=1e-5, rtol=1e-5)

    print("KERNEL_OK")
</pallas_src>

<mosaic_0001>
module attributes {stable_mosaic.version = 11 : i64} {
  func.func @_decoder_kernel(%arg0: memref<2x8x32xf32, #tpu.memory_space<vmem>>, %arg1: memref<32x128xf32, #tpu.memory_space<vmem>>, %arg2: memref<32x128xf32, #tpu.memory_space<vmem>>, %arg3: memref<1x128xf32, #tpu.memory_space<vmem>>, %arg4: memref<32x16xf32, #tpu.memory_space<vmem>>, %arg5: memref<1x16xf32, #tpu.memory_space<vmem>>, %arg6: memref<2x128xf32, #tpu.memory_space<vmem>>, %arg7: memref<2x32xf32, #tpu.memory_space<vmem>>) attributes {dimension_semantics = [], scalar_prefetch = 0 : i64, scratch_operands = 0 : i64, tpu.core_type = #tpu.core_type<tc>} {
    %c0 = arith.constant 0 : index
    %c0_0 = arith.constant 0 : index
    %c0_1 = arith.constant 0 : index
    %0 = vector.load %arg0[%c0, %c0_0, %c0_1] : memref<2x8x32xf32, #tpu.memory_space<vmem>>, vector<2x8x32xf32>
    %1 = vector.shape_cast %0 : vector<2x8x32xf32> to vector<16x32xf32>
    %c0_2 = arith.constant 0 : index
    %c0_3 = arith.constant 0 : index
    %2 = vector.load %arg1[%c0_2, %c0_3] : memref<32x128xf32, #tpu.memory_space<vmem>>, vector<32x128xf32>
    %cst = arith.constant dense<0.000000e+00> : vector<16x128xf32>
    %3 = tpu.matmul %1, %2, %cst {dimension_numbers = #tpu.dot_dimension_numbers<[1], [0], [0], [1], [0, 0, 1, 1], [], []>} : vector<16x32xf32>, vector<32x128xf32>, vector<16x128xf32> -> vector<16x128xf32>
    %c0_4 = arith.constant 0 : index
    %c0_5 = arith.constant 0 : index
    %4 = vector.load %arg3[%c0_4, %c0_5] : memref<1x128xf32, #tpu.memory_space<vmem>>, vector<1x128xf32>
    %5 = vector.broadcast %4 : vector<1x128xf32> to vector<16x128xf32>
    %6 = arith.addf %3, %5 : vector<16x128xf32>
    %7 = vector.shape_cast %6 : vector<16x128xf32> to vector<2x8x128xf32>
    %c0_6 = arith.constant 0 : index
    %c0_7 = arith.constant 0 : index
    %8 = vector.load %arg2[%c0_6, %c0_7] : memref<32x128xf32, #tpu.memory_space<vmem>>, vector<32x128xf32>
    %c0_8 = arith.constant 0 : index
    %c0_9 = arith.constant 0 : index
    %9 = vector.load %arg4[%c0_8, %c0_9] : memref<32x16xf32, #tpu.memory_space<vmem>>, vector<32x16xf32>
    %c0_10 = arith.constant 0 : index
    %c0_11 = arith.constant 0 : index
    %10 = vector.load %arg5[%c0_10, %c0_11] : memref<1x16xf32, #tpu.memory_space<vmem>>, vector<1x16xf32>
    %cst_12 = arith.constant 0.000000e+00 : f32
    %11 = vector.broadcast %cst_12 : f32 to vector<2x32xf32>
    %cst_13 = arith.constant 0.000000e+00 : f32
    %12 = vector.broadcast %cst_13 : f32 to vector<2x32xf32>
    %13 = vector.extract_strided_slice %7 {offsets = [0, 0, 0], sizes = [2, 1, 128], strides = [1, 1, 1]} : vector<2x8x128xf32> to vector<2x1x128xf32>
    %14 = vector.shape_cast %13 : vector<2x1x128xf32> to vector<2x128xf32>
    %cst_14 = arith.constant dense<0.000000e+00> : vector<2x128xf32>
    %15 = tpu.matmul %11, %8, %cst_14 {dimension_numbers = #tpu.dot_dimension_numbers<[1], [0], [0], [1], [0, 0, 1, 1], [], []>} : vector<2x32xf32>, vector<32x128xf32>, vector<2x128xf32> -> vector<2x128xf32>
    %16 = arith.addf %14, %15 : vector<2x128xf32>
    %17 = vector.extract_strided_slice %16 {offsets = [0, 0], sizes = [2, 96], strides = [1, 1]} : vector<2x128xf32> to vector<2x96xf32>
    %18 = arith.negf %17 : vector<2x96xf32>
    %19 = math.exp %18 : vector<2x96xf32>
    %cst_15 = arith.constant 1.000000e+00 : f32
    %20 = vector.broadcast %cst_15 : f32 to vector<2x96xf32>
    %21 = arith.addf %20, %19 : vector<2x96xf32>
    %22 = arith.divf %20, %21 : vector<2x96xf32>
    %23 = vector.extract_strided_slice %22 {offsets = [0, 0], sizes = [2, 32], strides = [1, 1]} : vector<2x96xf32> to vector<2x32xf32>
    %24 = vector.extract_strided_slice %22 {offsets = [0, 32], sizes = [2, 32], strides = [1, 1]} : vector<2x96xf32> to vector<2x32xf32>
    %25 = vector.extract_strided_slice %22 {offsets = [0, 64], sizes = [2, 32], strides = [1, 1]} : vector<2x96xf32> to vector<2x32xf32>
    %26 = vector.extract_strided_slice %16 {offsets = [0, 96], sizes = [2, 32], strides = [1, 1]} : vector<2x128xf32> to vector<2x32xf32>
    %27 = math.tanh %26 : vector<2x32xf32>
    %28 = arith.mulf %24, %12 : vector<2x32xf32>
    %29 = arith.mulf %23, %27 : vector<2x32xf32>
    %30 = arith.addf %28, %29 : vector<2x32xf32>
    %31 = math.tanh %30 : vector<2x32xf32>
    %32 = arith.mulf %25, %31 : vector<2x32xf32>
    %cst_16 = arith.constant dense<0.000000e+00> : vector<2x16xf32>
    %33 = tpu.matmul %32, %9, %cst_16 {dimension_numbers = #tpu.dot_dimension_numbers<[1], [0], [0], [1], [0, 0, 1, 1], [], []>} : vector<2x32xf32>, vector<32x16xf32>, vector<2x16xf32> -> vector<2x16xf32>
    %34 = vector.broadcast %10 : vector<1x16xf32> to vector<2x16xf32>
    %35 = arith.addf %33, %34 : vector<2x16xf32>
    %36 = vector.extract_strided_slice %7 {offsets = [0, 1, 0], sizes = [2, 1, 128], strides = [1, 1, 1]} : vector<2x8x128xf32> to vector<2x1x128xf32>
    %37 = vector.shape_cast %36 : vector<2x1x128xf32> to vector<2x128xf32>
    %cst_17 = arith.constant dense<0.000000e+00> : vector<2x128xf32>
    %38 = tpu.matmul %32, %8, %cst_17 {dimension_numbers = #tpu.dot_dimension_numbers<[1], [0], [0], [1], [0, 0, 1, 1], [], []>} : vector<2x32xf32>, vector<32x128xf32>, vector<2x128xf32> -> vector<2x128xf32>
    %39 = arith.addf %37, %38 : vector<2x128xf32>
    %40 = vector.extract_strided_slice %39 {offsets = [0, 0], sizes = [2, 96], strides = [1, 1]} : vector<2x128xf32> to vector<2x96xf32>
    %41 = arith.negf %40 : vector<2x96xf32>
    %42 = math.exp %41 : vector<2x96xf32>
    %cst_18 = arith.constant 1.000000e+00 : f32
    %43 = vector.broadcast %cst_18 : f32 to vector<2x96xf32>
    %44 = arith.addf %43, %42 : vector<2x96xf32>
    %45 = arith.divf %43, %44 : vector<2x96xf32>
    %46 = vector.extract_strided_slice %45 {offsets = [0, 0], sizes = [2, 32], strides = [1, 1]} : vector<2x96xf32> to vector<2x32xf32>
    %47 = vector.extract_strided_slice %45 {offsets = [0, 32], sizes = [2, 32], strides = [1, 1]} : vector<2x96xf32> to vector<2x32xf32>
    %48 = vector.extract_strided_slice %45 {offsets = [0, 64], sizes = [2, 32], strides = [1, 1]} : vector<2x96xf32> to vector<2x32xf32>
    %49 = vector.extract_strided_slice %39 {offsets = [0, 96], sizes = [2, 32], strides = [1, 1]} : vector<2x128xf32> to vector<2x32xf32>
    %50 = math.tanh %49 : vector<2x32xf32>
    %51 = arith.mulf %47, %30 : vector<2x32xf32>
    %52 = arith.mulf %46, %50 : vector<2x32xf32>
    %53 = arith.addf %51, %52 : vector<2x32xf32>
    %54 = math.tanh %53 : vector<2x32xf32>
    %55 = arith.mulf %48, %54 : vector<2x32xf32>
    %cst_19 = arith.constant dense<0.000000e+00> : vector<2x16xf32>
    %56 = tpu.matmul %55, %9, %cst_19 {dimension_numbers = #tpu.dot_dimension_numbers<[1], [0], [0], [1], [0, 0, 1, 1], [], []>} : vector<2x32xf32>, vector<32x16xf32>, vector<2x16xf32> -> vector<2x16xf32>
    %57 = vector.broadcast %10 : vector<1x16xf32> to vector<2x16xf32>
    %58 = arith.addf %56, %57 : vector<2x16xf32>
    %59 = vector.extract_strided_slice %7 {offsets = [0, 2, 0], sizes = [2, 1, 128], strides = [1, 1, 1]} : vector<2x8x128xf32> to vector<2x1x128xf32>
    %60 = vector.shape_cast %59 : vector<2x1x128xf32> to vector<2x128xf32>
    %cst_20 = arith.constant dense<0.000000e+00> : vector<2x128xf32>
    %61 = tpu.matmul %55, %8, %cst_20 {dimension_numbers = #tpu.dot_dimension_numbers<[1], [0], [0], [1], [0, 0, 1, 1], [], []>} : vector<2x32xf32>, vector<32x128xf32>, vector<2x128xf32> -> vector<2x128xf32>
    %62 = arith.addf %60, %61 : vector<2x128xf32>
    %63 = vector.extract_strided_slice %62 {offsets = [0, 0], sizes = [2, 96], strides = [1, 1]} : vector<2x128xf32> to vector<2x96xf32>
    %64 = arith.negf %63 : vector<2x96xf32>
    %65 = math.exp %64 : vector<2x96xf32>
    %cst_21 = arith.constant 1.000000e+00 : f32
    %66 = vector.broadcast %cst_21 : f32 to vector<2x96xf32>
    %67 = arith.addf %66, %65 : vector<2x96xf32>
    %68 = arith.divf %66, %67 : vector<2x96xf32>
    %69 = vector.extract_strided_slice %68 {offsets = [0, 0], sizes = [2, 32], strides = [1, 1]} : vector<2x96xf32> to vector<2x32xf32>
    %70 = vector.extract_strided_slice %68 {offsets = [0, 32], sizes = [2, 32], strides = [1, 1]} : vector<2x96xf32> to vector<2x32xf32>
    %71 = vector.extract_strided_slice %68 {offsets = [0, 64], sizes = [2, 32], strides = [1, 1]} : vector<2x96xf32> to vector<2x32xf32>
    %72 = vector.extract_strided_slice %62 {offsets = [0, 96], sizes = [2, 32], strides = [1, 1]} : vector<2x128xf32> to vector<2x32xf32>
    %73 = math.tanh %72 : vector<2x32xf32>
    %74 = arith.mulf %70, %53 : vector<2x32xf32>
    %75 = arith.mulf %69, %73 : vector<2x32xf32>
    %76 = arith.addf %74, %75 : vector<2x32xf32>
    %77 = math.tanh %76 : vector<2x32xf32>
    %78 = arith.mulf %71, %77 : vector<2x32xf32>
    %cst_22 = arith.constant dense<0.000000e+00> : vector<2x16xf32>
    %79 = tpu.matmul %78, %9, %cst_22 {dimension_numbers = #tpu.dot_dimension_numbers<[1], [0], [0], [1], [0, 0, 1, 1], [], []>} : vector<2x32xf32>, vector<32x16xf32>, vector<2x16xf32> -> vector<2x16xf32>
    %80 = vector.broadcast %10 : vector<1x16xf32> to vector<2x16xf32>
    %81 = arith.addf %79, %80 : vector<2x16xf32>
    %82 = vector.extract_strided_slice %7 {offsets = [0, 3, 0], sizes = [2, 1, 128], strides = [1, 1, 1]} : vector<2x8x128xf32> to vector<2x1x128xf32>
    %83 = vector.shape_cast %82 : vector<2x1x128xf32> to vector<2x128xf32>
    %cst_23 = arith.constant dense<0.000000e+00> : vector<2x128xf32>
    %84 = tpu.matmul %78, %8, %cst_23 {dimension_numbers = #tpu.dot_dimension_numbers<[1], [0], [0], [1], [0, 0, 1, 1], [], []>} : vector<2x32xf32>, vector<32x128xf32>, vector<2x128xf32> -> vector<2x128xf32>
    %85 = arith.addf %83, %84 : vector<2x128xf32>
    %86 = vector.extract_strided_slice %85 {offsets = [0, 0], sizes = [2, 96], strides = [1, 1]} : vector<2x128xf32> to vector<2x96xf32>
    %87 = arith.negf %86 : vector<2x96xf32>
    %88 = math.exp %87 : vector<2x96xf32>
    %cst_24 = arith.constant 1.000000e+00 : f32
    %89 = vector.broadcast %cst_24 : f32 to vector<2x96xf32>
    %90 = arith.addf %89, %88 : vector<2x96xf32>
    %91 = arith.divf %89, %90 : vector<2x96xf32>
    %92 = vector.extract_strided_slice %91 {offsets = [0, 0], sizes = [2, 32], strides = [1, 1]} : vector<2x96xf32> to vector<2x32xf32>
    %93 = vector.extract_strided_slice %91 {offsets = [0, 32], sizes = [2, 32], strides = [1, 1]} : vector<2x96xf32> to vector<2x32xf32>
    %94 = vector.extract_strided_slice %91 {offsets = [0, 64], sizes = [2, 32], strides = [1, 1]} : vector<2x96xf32> to vector<2x32xf32>
    %95 = vector.extract_strided_slice %85 {offsets = [0, 96], sizes = [2, 32], strides = [1, 1]} : vector<2x128xf32> to vector<2x32xf32>
    %96 = math.tanh %95 : vector<2x32xf32>
    %97 = arith.mulf %93, %76 : vector<2x32xf32>
    %98 = arith.mulf %92, %96 : vector<2x32xf32>
    %99 = arith.addf %97, %98 : vector<2x32xf32>
    %100 = math.tanh %99 : vector<2x32xf32>
    %101 = arith.mulf %94, %100 : vector<2x32xf32>
    %cst_25 = arith.constant dense<0.000000e+00> : vector<2x16xf32>
    %102 = tpu.matmul %101, %9, %cst_25 {dimension_numbers = #tpu.dot_dimension_numbers<[1], [0], [0], [1], [0, 0, 1, 1], [], []>} : vector<2x32xf32>, vector<32x16xf32>, vector<2x16xf32> -> vector<2x16xf32>
    %103 = vector.broadcast %10 : vector<1x16xf32> to vector<2x16xf32>
    %104 = arith.addf %102, %103 : vector<2x16xf32>
    %105 = vector.extract_strided_slice %7 {offsets = [0, 4, 0], sizes = [2, 1, 128], strides = [1, 1, 1]} : vector<2x8x128xf32> to vector<2x1x128xf32>
    %106 = vector.shape_cast %105 : vector<2x1x128xf32> to vector<2x128xf32>
    %cst_26 = arith.constant dense<0.000000e+00> : vector<2x128xf32>
    %107 = tpu.matmul %101, %8, %cst_26 {dimension_numbers = #tpu.dot_dimension_numbers<[1], [0], [0], [1], [0, 0, 1, 1], [], []>} : vector<2x32xf32>, vector<32x128xf32>, vector<2x128xf32> -> vector<2x128xf32>
    %108 = arith.addf %106, %107 : vector<2x128xf32>
    %109 = vector.extract_strided_slice %108 {offsets = [0, 0], sizes = [2, 96], strides = [1, 1]} : vector<2x128xf32> to vector<2x96xf32>
    %110 = arith.negf %109 : vector<2x96xf32>
    %111 = math.exp %110 : vector<2x96xf32>
    %cst_27 = arith.constant 1.000000e+00 : f32
    %112 = vector.broadcast %cst_27 : f32 to vector<2x96xf32>
    %113 = arith.addf %112, %111 : vector<2x96xf32>
    %114 = arith.divf %112, %113 : vector<2x96xf32>
    %115 = vector.extract_strided_slice %114 {offsets = [0, 0], sizes = [2, 32], strides = [1, 1]} : vector<2x96xf32> to vector<2x32xf32>
    %116 = vector.extract_strided_slice %114 {offsets = [0, 32], sizes = [2, 32], strides = [1, 1]} : vector<2x96xf32> to vector<2x32xf32>
    %117 = vector.extract_strided_slice %114 {offsets = [0, 64], sizes = [2, 32], strides = [1, 1]} : vector<2x96xf32> to vector<2x32xf32>
    %118 = vector.extract_strided_slice %108 {offsets = [0, 96], sizes = [2, 32], strides = [1, 1]} : vector<2x128xf32> to vector<2x32xf32>
    %119 = math.tanh %118 : vector<2x32xf32>
    %120 = arith.mulf %116, %99 : vector<2x32xf32>
    %121 = arith.mulf %115, %119 : vector<2x32xf32>
    %122 = arith.addf %120, %121 : vector<2x32xf32>
    %123 = math.tanh %122 : vector<2x32xf32>
    %124 = arith.mulf %117, %123 : vector<2x32xf32>
    %cst_28 = arith.constant dense<0.000000e+00> : vector<2x16xf32>
    %125 = tpu.matmul %124, %9, %cst_28 {dimension_numbers = #tpu.dot_dimension_numbers<[1], [0], [0], [1], [0, 0, 1, 1], [], []>} : vector<2x32xf32>, vector<32x16xf32>, vector<2x16xf32> -> vector<2x16xf32>
    %126 = vector.broadcast %10 : vector<1x16xf32> to vector<2x16xf32>
    %127 = arith.addf %125, %126 : vector<2x16xf32>
    %128 = vector.extract_strided_slice %7 {offsets = [0, 5, 0], sizes = [2, 1, 128], strides = [1, 1, 1]} : vector<2x8x128xf32> to vector<2x1x128xf32>
    %129 = vector.shape_cast %128 : vector<2x1x128xf32> to vector<2x128xf32>
    %cst_29 = arith.constant dense<0.000000e+00> : vector<2x128xf32>
    %130 = tpu.matmul %124, %8, %cst_29 {dimension_numbers = #tpu.dot_dimension_numbers<[1], [0], [0], [1], [0, 0, 1, 1], [], []>} : vector<2x32xf32>, vector<32x128xf32>, vector<2x128xf32> -> vector<2x128xf32>
    %131 = arith.addf %129, %130 : vector<2x128xf32>
    %132 = vector.extract_strided_slice %131 {offsets = [0, 0], sizes = [2, 96], strides = [1, 1]} : vector<2x128xf32> to vector<2x96xf32>
    %133 = arith.negf %132 : vector<2x96xf32>
    %134 = math.exp %133 : vector<2x96xf32>
    %cst_30 = arith.constant 1.000000e+00 : f32
    %135 = vector.broadcast %cst_30 : f32 to vector<2x96xf32>
    %136 = arith.addf %135, %134 : vector<2x96xf32>
    %137 = arith.divf %135, %136 : vector<2x96xf32>
    %138 = vector.extract_strided_slice %137 {offsets = [0, 0], sizes = [2, 32], strides = [1, 1]} : vector<2x96xf32> to vector<2x32xf32>
    %139 = vector.extract_strided_slice %137 {offsets = [0, 32], sizes = [2, 32], strides = [1, 1]} : vector<2x96xf32> to vector<2x32xf32>
    %140 = vector.extract_strided_slice %137 {offsets = [0, 64], sizes = [2, 32], strides = [1, 1]} : vector<2x96xf32> to vector<2x32xf32>
    %141 = vector.extract_strided_slice %131 {offsets = [0, 96], sizes = [2, 32], strides = [1, 1]} : vector<2x128xf32> to vector<2x32xf32>
    %142 = math.tanh %141 : vector<2x32xf32>
    %143 = arith.mulf %139, %122 : vector<2x32xf32>
    %144 = arith.mulf %138, %142 : vector<2x32xf32>
    %145 = arith.addf %143, %144 : vector<2x32xf32>
    %146 = math.tanh %145 : vector<2x32xf32>
    %147 = arith.mulf %140, %146 : vector<2x32xf32>
    %cst_31 = arith.constant dense<0.000000e+00> : vector<2x16xf32>
    %148 = tpu.matmul %147, %9, %cst_31 {dimension_numbers = #tpu.dot_dimension_numbers<[1], [0], [0], [1], [0, 0, 1, 1], [], []>} : vector<2x32xf32>, vector<32x16xf32>, vector<2x16xf32> -> vector<2x16xf32>
    %149 = vector.broadcast %10 : vector<1x16xf32> to vector<2x16xf32>
    %150 = arith.addf %148, %149 : vector<2x16xf32>
    %151 = vector.extract_strided_slice %7 {offsets = [0, 6, 0], sizes = [2, 1, 128], strides = [1, 1, 1]} : vector<2x8x128xf32> to vector<2x1x128xf32>
    %152 = vector.shape_cast %151 : vector<2x1x128xf32> to vector<2x128xf32>
    %cst_32 = arith.constant dense<0.000000e+00> : vector<2x128xf32>
    %153 = tpu.matmul %147, %8, %cst_32 {dimension_numbers = #tpu.dot_dimension_numbers<[1], [0], [0], [1], [0, 0, 1, 1], [], []>} : vector<2x32xf32>, vector<32x128xf32>, vector<2x128xf32> -> vector<2x128xf32>
    %154 = arith.addf %152, %153 : vector<2x128xf32>
    %155 = vector.extract_strided_slice %154 {offsets = [0, 0], sizes = [2, 96], strides = [1, 1]} : vector<2x128xf32> to vector<2x96xf32>
    %156 = arith.negf %155 : vector<2x96xf32>
    %157 = math.exp %156 : vector<2x96xf32>
    %cst_33 = arith.constant 1.000000e+00 : f32
    %158 = vector.broadcast %cst_33 : f32 to vector<2x96xf32>
    %159 = arith.addf %158, %157 : vector<2x96xf32>
    %160 = arith.divf %158, %159 : vector<2x96xf32>
    %161 = vector.extract_strided_slice %160 {offsets = [0, 0], sizes = [2, 32], strides = [1, 1]} : vector<2x96xf32> to vector<2x32xf32>
    %162 = vector.extract_strided_slice %160 {offsets = [0, 32], sizes = [2, 32], strides = [1, 1]} : vector<2x96xf32> to vector<2x32xf32>
    %163 = vector.extract_strided_slice %160 {offsets = [0, 64], sizes = [2, 32], strides = [1, 1]} : vector<2x96xf32> to vector<2x32xf32>
    %164 = vector.extract_strided_slice %154 {offsets = [0, 96], sizes = [2, 32], strides = [1, 1]} : vector<2x128xf32> to vector<2x32xf32>
    %165 = math.tanh %164 : vector<2x32xf32>
    %166 = arith.mulf %162, %145 : vector<2x32xf32>
    %167 = arith.mulf %161, %165 : vector<2x32xf32>
    %168 = arith.addf %166, %167 : vector<2x32xf32>
    %169 = math.tanh %168 : vector<2x32xf32>
    %170 = arith.mulf %163, %169 : vector<2x32xf32>
    %cst_34 = arith.constant dense<0.000000e+00> : vector<2x16xf32>
    %171 = tpu.matmul %170, %9, %cst_34 {dimension_numbers = #tpu.dot_dimension_numbers<[1], [0], [0], [1], [0, 0, 1, 1], [], []>} : vector<2x32xf32>, vector<32x16xf32>, vector<2x16xf32> -> vector<2x16xf32>
    %172 = vector.broadcast %10 : vector<1x16xf32> to vector<2x16xf32>
    %173 = arith.addf %171, %172 : vector<2x16xf32>
    %174 = vector.extract_strided_slice %7 {offsets = [0, 7, 0], sizes = [2, 1, 128], strides = [1, 1, 1]} : vector<2x8x128xf32> to vector<2x1x128xf32>
    %175 = vector.shape_cast %174 : vector<2x1x128xf32> to vector<2x128xf32>
    %cst_35 = arith.constant dense<0.000000e+00> : vector<2x128xf32>
    %176 = tpu.matmul %170, %8, %cst_35 {dimension_numbers = #tpu.dot_dimension_numbers<[1], [0], [0], [1], [0, 0, 1, 1], [], []>} : vector<2x32xf32>, vector<32x128xf32>, vector<2x128xf32> -> vector<2x128xf32>
    %177 = arith.addf %175, %176 : vector<2x128xf32>
    %178 = vector.extract_strided_slice %177 {offsets = [0, 0], sizes = [2, 96], strides = [1, 1]} : vector<2x128xf32> to vector<2x96xf32>
    %179 = arith.negf %178 : vector<2x96xf32>
    %180 = math.exp %179 : vector<2x96xf32>
    %cst_36 = arith.constant 1.000000e+00 : f32
    %181 = vector.broadcast %cst_36 : f32 to vector<2x96xf32>
    %182 = arith.addf %181, %180 : vector<2x96xf32>
    %183 = arith.divf %181, %182 : vector<2x96xf32>
    %184 = vector.extract_strided_slice %183 {offsets = [0, 0], sizes = [2, 32], strides = [1, 1]} : vector<2x96xf32> to vector<2x32xf32>
    %185 = vector.extract_strided_slice %183 {offsets = [0, 32], sizes = [2, 32], strides = [1, 1]} : vector<2x96xf32> to vector<2x32xf32>
    %186 = vector.extract_strided_slice %183 {offsets = [0, 64], sizes = [2, 32], strides = [1, 1]} : vector<2x96xf32> to vector<2x32xf32>
    %187 = vector.extract_strided_slice %177 {offsets = [0, 96], sizes = [2, 32], strides = [1, 1]} : vector<2x128xf32> to vector<2x32xf32>
    %188 = math.tanh %187 : vector<2x32xf32>
    %189 = arith.mulf %185, %168 : vector<2x32xf32>
    %190 = arith.mulf %184, %188 : vector<2x32xf32>
    %191 = arith.addf %189, %190 : vector<2x32xf32>
    %192 = math.tanh %191 : vector<2x32xf32>
    %193 = arith.mulf %186, %192 : vector<2x32xf32>
    %cst_37 = arith.constant dense<0.000000e+00> : vector<2x16xf32>
    %194 = tpu.matmul %193, %9, %cst_37 {dimension_numbers = #tpu.dot_dimension_numbers<[1], [0], [0], [1], [0, 0, 1, 1], [], []>} : vector<2x32xf32>, vector<32x16xf32>, vector<2x16xf32> -> vector<2x16xf32>
    %195 = vector.broadcast %10 : vector<1x16xf32> to vector<2x16xf32>
    %196 = arith.addf %194, %195 : vector<2x16xf32>
    %197 = tpu.concatenate %35, %58, %81, %104, %127, %150, %173, %196 in 1 : vector<2x16xf32>, vector<2x16xf32>, vector<2x16xf32>, vector<2x16xf32>, vector<2x16xf32>, vector<2x16xf32>, vector<2x16xf32>, vector<2x16xf32> -> vector<2x128xf32>
    %198 = arith.negf %197 : vector<2x128xf32>
    %199 = math.exp %198 : vector<2x128xf32>
    %cst_38 = arith.constant 1.000000e+00 : f32
    %200 = vector.broadcast %cst_38 : f32 to vector<2x128xf32>
    %201 = arith.addf %200, %199 : vector<2x128xf32>
    %202 = arith.divf %200, %201 : vector<2x128xf32>
    %c0_39 = arith.constant 0 : index
    %c0_40 = arith.constant 0 : index
    %203 = vector.load %arg6[%c0_39, %c0_40] : memref<2x128xf32, #tpu.memory_space<vmem>>, vector<2x128xf32>
    tpu.vector_store %arg6[%c0_39, %c0_40], %202 {strides = array<i32>} : memref<2x128xf32, #tpu.memory_space<vmem>>, vector<2x128xf32>,
    %c0_41 = arith.constant 0 : index
    %c0_42 = arith.constant 0 : index
    %204 = vector.load %arg7[%c0_41, %c0_42] : memref<2x32xf32, #tpu.memory_space<vmem>>, vector<2x32xf32>
    tpu.vector_store %arg7[%c0_41, %c0_42], %193 {strides = array<i32>} : memref<2x32xf32, #tpu.memory_space<vmem>>, vector<2x32xf32>,
    return
  }
}

</mosaic_0001>

<llo_original>
// kernel: tpu_custom_call.1
$region0: #{tpu_custom_call.1}
  #allocation0 [shape = 'u32[]', space=smem, size = 0x4, offset = 0x4, fixed_abs, tag = 'smem constant byte address 0x4 - core index']
  #allocation1 [shape = 'u32[144,128]{1,0:T(1,128)}', space=vmem, size = 0x12000, scoped, tag = 'internal scratch']
  %s0 = inlined_call_operand.vmem [shape: f32[2,8,32], index: 0, kind: input, shape index: {}]
  %s1 = inlined_call_operand.vmem [shape: f32[32,128], index: 1, kind: input, shape index: {}]
  %s2 = inlined_call_operand.hbm [shape: f32[32,128], index: 2, kind: input, shape index: {}]
  %s3 = inlined_call_operand.vmem [shape: f32[1,128], index: 3, kind: input, shape index: {}]
  %s4 = inlined_call_operand.vmem [shape: f32[32,16], index: 4, kind: input, shape index: {}]
  %s5 = inlined_call_operand.vmem [shape: f32[1,16], index: 5, kind: input, shape index: {}]
  %s6 = inlined_call_operand.hbm [shape: f32[2,128], index: 6, kind: output, shape index: {0}]
  %s7 = inlined_call_operand.hbm [shape: f32[2,32], index: 7, kind: output, shape index: {1}]
  %8 = xla_tuple %s6, %s7
  %s9 = sld [smem:[#allocation0]]
  $region46: #{tpu_custom_call.1} parent=0
    _
  %s11 = ssub.s32 1, %s9
  %s12 = scalar_select 0, %s11, %s9
  $region1: #{tpu_custom_call.1} parent=0
    #allocation2 [shape = 'u8[16384]{0}', space=vmem, size = 0x4000, scoped, tag = 'input window, operand 2, single buffered']
    #allocation3 [shape = 's32[1]{0}', space=sflag, size = 0x4, scoped, tag = 'scoped memory for tpu_custom_call.1']
    #allocation4 [shape = 's32[1]{0}', space=sflag, size = 0x4, scoped, tag = 'scoped memory for tpu_custom_call.1']
    #allocation5 [shape = 'u8[1024]{0}', space=vmem, size = 0x400, scoped, tag = 'output window, operand 0, single buffered']
    #allocation6 [shape = 'u8[1024]{0}', space=vmem, size = 0x400, scoped, tag = 'output window, operand 1, single buffered']
    #allocation7 [shape = 's32[1]{0}', space=sflag, size = 0x4, scoped, tag = 'scoped memory for tpu_custom_call.1']
    %13 = vsyncpa [#allocation3], 0
    %14 = vsyncpa [#allocation4], 0
    %15 = vsyncpa [#allocation7], 0
    // Predicated region
    $region2: #{tpu_custom_call.1} parent=1 // pred_check
      _
    $region3: #{tpu_custom_call.1} parent=1 // pred_check_branch
      %17 = sbr.rel (0) target = $region5
    $region4: #{tpu_custom_call.1} parent=1 // pred_region
      _
    $region5: #{tpu_custom_call.1} parent=1 // pred_fallthru
      _
    // Predicated region
    $region6: #{tpu_custom_call.1} parent=1 // pred_check
      _
    $region7: #{tpu_custom_call.1} parent=1 // pred_check_branch
      %19 = sbr.rel (0) target = $region9
    $region8: #{tpu_custom_call.1} parent=1 // pred_region
      _
    $region9: #{tpu_custom_call.1} parent=1 // pred_fallthru
      _
    // Predicated region
    $region10: #{tpu_custom_call.1} parent=1 // pred_check
      _
    $region11: #{tpu_custom_call.1} parent=1 // pred_check_branch
      %21 = sbr.rel (0) target = $region13
    $region12: #{tpu_custom_call.1} parent=1 // pred_region
      %s23 = ssub.s32 512, 512
      %24 = vsyncadd [#allocation3], %s23
      %s25 = sshll.u32 [#allocation2], 4
      %s26 = int_to_ptr.vmem [resolvable:$true] %s25
      %31 = dma.hbm_to_vmem [thread:$0]  %s2, 512, %s26, [#allocation3], 128, 128, 8
    $region13: #{tpu_custom_call.1} parent=1 // pred_fallthru
      _
    // Predicated region
    $region14: #{tpu_custom_call.1} parent=1 // pred_check
      _
    $region15: #{tpu_custom_call.1} parent=1 // pred_check_branch
      %33 = sbr.rel (0) target = $region17
    $region16: #{tpu_custom_call.1} parent=1 // pred_region
      _
    $region17: #{tpu_custom_call.1} parent=1 // pred_fallthru
      _
    // Predicated region
    $region18: #{tpu_custom_call.1} parent=1 // pred_check
      _
    $region19: #{tpu_custom_call.1} parent=1 // pred_check_branch
      %35 = sbr.rel (0) target = $region21
    $region20: #{tpu_custom_call.1} parent=1 // pred_region
      _
    $region21: #{tpu_custom_call.1} parent=1 // pred_fallthru
      _
    // Predicated region
    $region22: #{tpu_custom_call.1} parent=1 // pred_check
      _
    $region23: #{tpu_custom_call.1} parent=1 // pred_check_branch
      %37 = sbr.rel (0) target = $region25
    $region24: #{tpu_custom_call.1} parent=1 // pred_region
      _
    $region25: #{tpu_custom_call.1} parent=1 // pred_fallthru
      _
    // Predicated region
    $region26: #{tpu_custom_call.1} parent=1 // pred_check
      _
    $region27: #{tpu_custom_call.1} parent=1 // pred_check_branch
      %39 = sbr.rel (0) target = $region29
    $region28: #{tpu_custom_call.1} parent=1 // pred_region
      %40 = dma.done [#allocation3], 512
    $region29: #{tpu_custom_call.1} parent=1 // pred_fallthru
      _
    %v41 = vld [vmem:[%s0] sm:$0xff]
    %v42 = vld [vmem:[%s0 + $0x8] sm:$0xff]
    %v43 = vld [vmem:[%s1] sm:$0xff]
    %v44 = vld [vmem:[%s1 + $0x8] sm:$0xff]
    %v45 = vld [vmem:[%s1 + $0x10] sm:$0xff]
    %v46 = vld [vmem:[%s1 + $0x18] sm:$0xff]
    %v47 = vld [vmem:[%s3] sm:$0x1]
    %v49 = vlaneseq
    %v50 = vshrl.u32 %v49, 7
    %v51 = vsub.s32 0, %v50
    %v52 = vrot.slane %v47, %v51
    %vm54 = vcmask 261120
    %v56 = vsel %vm54, %v41, 0
    %v59 = vsel %vm54, %v42, 0
    %61 = vmatprep.subr.mxu0 0.0
    %62 = vmatpush1.msra.mxu0 0.0
    %63 = vmatprep.subr.mxu0 0.0
    %64 = vmatpush1.msra.mxu0 0.0
    %65 = vmatprep.subr.mxu0 0.0
    %66 = vmatpush1.msra.mxu0 0.0
    %67 = vmatprep.subr.mxu0 0.0
    %68 = vmatpush1.msra.mxu0 0.0
    %69 = vmatprep.subr.mxu0 0.0
    %70 = vmatpush1.msra.mxu0 0.0
    %71 = vmatprep.subr.mxu0 0.0
    %72 = vmatpush1.msra.mxu0 0.0
    %73 = vmatprep.subr.mxu0 0.0
    %74 = vmatpush1.msra.mxu0 0.0
    %75 = vmatprep.subr.mxu0 0.0
    %76 = vmatpush1.msra.mxu0 0.0
    %77 = vmatprep.subr.mxu0 0.0
    %78 = vmatpush1.msra.mxu0 0.0
    %79 = vmatprep.subr.mxu0 0.0
    %80 = vmatpush1.msra.mxu0 0.0
    %81 = vmatprep.subr.mxu0 0.0
    %82 = vmatpush1.msra.mxu0 0.0
    %83 = vmatprep.subr.mxu0 0.0
    %84 = vmatpush1.msra.mxu0 0.0
    %85 = vmatprep.subr.mxu0 0.0
    %86 = vmatpush1.msra.mxu0 %v46
    %87 = vmatprep.subr.mxu0 0.0
    %88 = vmatpush1.msra.mxu0 %v45
    %89 = vmatprep.subr.mxu0 0.0
    %90 = vmatpush1.msra.mxu0 %v44
    %91 = vmatprep.subr.mxu0 0.0
    %92 = vmatpush1.msra.mxu0 %v43
    %93 = vmatprep.subr.mxu0 0.0
    %94 = vmatpush2.msra.mxu0 0.0
    %95 = vmatprep.subr.mxu0 0.0
    %96 = vmatpush2.msra.mxu0 0.0
    %97 = vmatprep.subr.mxu0 0.0
    %98 = vmatpush2.msra.mxu0 0.0
    %99 = vmatprep.subr.mxu0 0.0
    %100 = vmatpush2.msra.mxu0 0.0
    %101 = vmatprep.subr.mxu0 0.0
    %102 = vmatpush2.msra.mxu0 0.0
    %103 = vmatprep.subr.mxu0 0.0
    %104 = vmatpush2.msra.mxu0 0.0
    %105 = vmatprep.subr.mxu0 0.0
    %106 = vmatpush2.msra.mxu0 0.0
    %107 = vmatprep.subr.mxu0 0.0
    %108 = vmatpush2.msra.mxu0 0.0
    %109 = vmatprep.subr.mxu0 0.0
    %110 = vmatpush2.msra.mxu0 0.0
    %111 = vmatprep.subr.mxu0 0.0
    %112 = vmatpush2.msra.mxu0 0.0
    %113 = vmatprep.subr.mxu0 0.0
    %114 = vmatpush2.msra.mxu0 0.0
    %115 = vmatprep.subr.mxu0 0.0
    %116 = vmatpush2.msra.mxu0 0.0
    %117 = vmatprep.subr.mxu0 0.0
    %118 = vmatpush2.msra.mxu0 0.0
    %119 = vmatprep.subr.mxu0 0.0
    %120 = vmatpush2.msra.mxu0 0.0
    %121 = vmatprep.subr.mxu0 0.0
    %122 = vmatpush2.msra.mxu0 0.0
    %123 = vmatprep.subr.mxu0 0.0
    %124 = vmatpush2.msra.mxu0 0.0
    %125 = vmatprep.mubr.f32.mxu0 0.0
    %126 = vmatmul.mubr.f32.gmra.mxu0 %v56
    %v127 = vpop.f32.mrf.mxu0
    %v128 = vadd.f32 %v52, %v127
    %v129 = vpop.f32.mrf.mxu0
    %130 = vmatprep.mubr.f32.mxu0 0.0
    %131 = vmatmul.mubr.f32.gmra.mxu0 %v59
    %v132 = vpop.f32.mrf.mxu0
    %v133 = vadd.f32 %v52, %v132
    %v134 = vpop.f32.mrf.mxu0
    %135 = vdwg.mxu0
    %v136 = vld [vmem:[#allocation2] sm:$0xff]
    %v137 = vld [vmem:[#allocation2 + $0x8] sm:$0xff]
    %v138 = vld [vmem:[#allocation2 + $0x10] sm:$0xff]
    %v139 = vld [vmem:[#allocation2 + $0x18] sm:$0xff]
    %v140 = vld [vmem:[%s4] sm:$0xff]
    %v141 = vld [vmem:[%s4 + $0x8] sm:$0xff]
    %v142 = vld [vmem:[%s4 + $0x10] sm:$0xff]
    %v143 = vld [vmem:[%s4 + $0x18] sm:$0xff]
    %v144 = vld [vmem:[%s5] sm:$0x1]
    %v146 = vsel %vm54, 0.0, 0
    %148 = vmatprep.subr.mxu0 0.0
    %149 = vmatpush1.msra.mxu0 0.0
    %150 = vmatprep.subr.mxu0 0.0
    %151 = vmatpush1.msra.mxu0 0.0
    %152 = vmatprep.subr.mxu0 0.0
    %153 = vmatpush1.msra.mxu0 0.0
    %154 = vmatprep.subr.mxu0 0.0
    %155 = vmatpush1.msra.mxu0 0.0
    %156 = vmatprep.subr.mxu0 0.0
    %157 = vmatpush1.msra.mxu0 0.0
    %158 = vmatprep.subr.mxu0 0.0
    %159 = vmatpush1.msra.mxu0 0.0
    %160 = vmatprep.subr.mxu0 0.0
    %161 = vmatpush1.msra.mxu0 0.0
    %162 = vmatprep.subr.mxu0 0.0
    %163 = vmatpush1.msra.mxu0 0.0
    %164 = vmatprep.subr.mxu0 0.0
    %165 = vmatpush1.msra.mxu0 0.0
    %166 = vmatprep.subr.mxu0 0.0
    %167 = vmatpush1.msra.mxu0 0.0
    %168 = vmatprep.subr.mxu0 0.0
    %169 = vmatpush1.msra.mxu0 0.0
    %170 = vmatprep.subr.mxu0 0.0
    %171 = vmatpush1.msra.mxu0 0.0
    %172 = vmatprep.subr.mxu0 0.0
    %173 = vmatpush1.msra.mxu0 %v139
    %174 = vmatprep.subr.mxu0 0.0
    %175 = vmatpush1.msra.mxu0 %v138
    %176 = vmatprep.subr.mxu0 0.0
    %177 = vmatpush1.msra.mxu0 %v137
    %178 = vmatprep.subr.mxu0 0.0
    %179 = vmatpush1.msra.mxu0 %v136
    %180 = vmatprep.subr.mxu0 0.0
    %181 = vmatpush2.msra.mxu0 0.0
    %182 = vmatprep.subr.mxu0 0.0
    %183 = vmatpush2.msra.mxu0 0.0
    %184 = vmatprep.subr.mxu0 0.0
    %185 = vmatpush2.msra.mxu0 0.0
    %186 = vmatprep.subr.mxu0 0.0
    %187 = vmatpush2.msra.mxu0 0.0
    %188 = vmatprep.subr.mxu0 0.0
    %189 = vmatpush2.msra.mxu0 0.0
    %190 = vmatprep.subr.mxu0 0.0
    %191 = vmatpush2.msra.mxu0 0.0
    %192 = vmatprep.subr.mxu0 0.0
    %193 = vmatpush2.msra.mxu0 0.0
    %194 = vmatprep.subr.mxu0 0.0
    %195 = vmatpush2.msra.mxu0 0.0
    %196 = vmatprep.subr.mxu0 0.0
    %197 = vmatpush2.msra.mxu0 0.0
    %198 = vmatprep.subr.mxu0 0.0
    %199 = vmatpush2.msra.mxu0 0.0
    %200 = vmatprep.subr.mxu0 0.0
    %201 = vmatpush2.msra.mxu0 0.0
    %202 = vmatprep.subr.mxu0 0.0
    %203 = vmatpush2.msra.mxu0 0.0
    %204 = vmatprep.subr.mxu0 0.0
    %205 = vmatpush2.msra.mxu0 0.0
    %206 = vmatprep.subr.mxu0 0.0
    %207 = vmatpush2.msra.mxu0 0.0
    %208 = vmatprep.subr.mxu0 0.0
    %209 = vmatpush2.msra.mxu0 0.0
    %210 = vmatprep.subr.mxu0 0.0
    %211 = vmatpush2.msra.mxu0 0.0
    %212 = vmatprep.mubr.f32.mxu0 0.0
    %213 = vmatmul.mubr.f32.gmra.mxu0 %v146
    %v214 = vpop.f32.mrf.mxu0
    %v215 = vadd.f32 0.0, %v214
    %v216 = vpop.f32.mrf.mxu0
    %217 = vdwg.mxu0
    %v219 = vrot.slane %v215, 1
    %v222 = vadd.f32 %v128, %v215
    %v223 = vadd.f32 %v133, %v219
    %v224 = vxor.u32 %v222, 2147483648
    %v225 = vxor.u32 %v223, 2147483648
    %v226 = vmul.f32 %v224, 1.442695
    %v227 = vpow.pop %v226
    %v228 = vmul.f32 %v225, 1.442695
    %v229 = vpow.pop %v228
    %v230 = vadd.f32 %v227, 1.0
    %v231 = vadd.f32 %v229, 1.0
    %v232 = vrcp.pop %v230
    %v233 = vmul.f32 1.0, %v232
    %v234 = vrcp.pop %v231
    %v235 = vmul.f32 1.0, %v234
    %v236 = vtanh.pop %v222
    %v237 = vtanh.pop %v223
    %v238 = vmul.f32 %v233, 0.0
    %v239 = vmul.f32 %v235, 0.0
    %242 = vrot.lane.b32.xlu0 %v236, 32
    %v243 = vpop.permute.xlu0 %242
    %244 = vrot.lane.b32.xlu0 %v237, 32
    %v245 = vpop.permute.xlu0 %244
    %v248 = vmul.f32 %v233, %v243
    %v249 = vmul.f32 %v235, %v245
    %252 = vrot.lane.b32.xlu0 %v248, 32
    %v253 = vpop.permute.xlu0 %252
    %254 = vrot.lane.b32.xlu0 %v249, 32
    %v255 = vpop.permute.xlu0 %254
    %v258 = vadd.f32 %v238, %v253
    %v259 = vadd.f32 %v239, %v255
    %v260 = vtanh.pop %v258
    %v261 = vtanh.pop %v259
    %264 = vrot.lane.b32.xlu0 %v260, 32
    %v265 = vpop.permute.xlu0 %264
    %266 = vrot.lane.b32.xlu0 %v261, 32
    %v267 = vpop.permute.xlu0 %266
    %v270 = vmul.f32 %v233, %v265
    %v271 = vmul.f32 %v235, %v267
    %v273 = vlaneseq
    %v274 = vshrl.u32 %v273, 7
    %v275 = vsub.s32 0, %v274
    %v276 = vrot.slane %v144, %v275
    %v280 = vrot.slane %v271, 7
    %vm281 = vcmask 1041409
    %v282 = vsel %vm281, %v280, %v270
    %283 = vrot.lane.b32.xlu0 %v282, 64
    %v284 = vpop.permute.xlu0 %283
    %v285 = vsel %vm54, %v284, 0
    %287 = vmatprep.subr.mxu0 0.0
    %288 = vmatpush1.msra.mxu0 0.0
    %289 = vmatprep.subr.mxu0 0.0
    %290 = vmatpush1.msra.mxu0 0.0
    %291 = vmatprep.subr.mxu0 0.0
    %292 = vmatpush1.msra.mxu0 0.0
    %293 = vmatprep.subr.mxu0 0.0
    %294 = vmatpush1.msra.mxu0 0.0
    %295 = vmatprep.subr.mxu0 0.0
    %296 = vmatpush1.msra.mxu0 0.0
    %297 = vmatprep.subr.mxu0 0.0
    %298 = vmatpush1.msra.mxu0 0.0
    %299 = vmatprep.subr.mxu0 0.0
    %300 = vmatpush1.msra.mxu0 0.0
    %301 = vmatprep.subr.mxu0 0.0
    %302 = vmatpush1.msra.mxu0 0.0
    %303 = vmatprep.subr.mxu0 0.0
    %304 = vmatpush1.msra.mxu0 0.0
    %305 = vmatprep.subr.mxu0 0.0
    %306 = vmatpush1.msra.mxu0 0.0
    %307 = vmatprep.subr.mxu0 0.0
    %308 = vmatpush1.msra.mxu0 0.0
    %309 = vmatprep.subr.mxu0 0.0
    %310 = vmatpush1.msra.mxu0 0.0
    %311 = vmatprep.subr.mxu0 0.0
    %312 = vmatpush1.msra.mxu0 %v143
    %313 = vmatprep.subr.mxu0 0.0
    %314 = vmatpush1.msra.mxu0 %v142
    %315 = vmatprep.subr.mxu0 0.0
    %316 = vmatpush1.msra.mxu0 %v141
    %317 = vmatprep.subr.mxu0 0.0
    %318 = vmatpush1.msra.mxu0 %v140
    %319 = vmatprep.subr.mxu0 0.0
    %320 = vmatpush2.msra.mxu0 0.0
    %321 = vmatprep.subr.mxu0 0.0
    %322 = vmatpush2.msra.mxu0 0.0
    %323 = vmatprep.subr.mxu0 0.0
    %324 = vmatpush2.msra.mxu0 0.0
    %325 = vmatprep.subr.mxu0 0.0
    %326 = vmatpush2.msra.mxu0 0.0
    %327 = vmatprep.subr.mxu0 0.0
    %328 = vmatpush2.msra.mxu0 0.0
    %329 = vmatprep.subr.mxu0 0.0
    %330 = vmatpush2.msra.mxu0 0.0
    %331 = vmatprep.subr.mxu0 0.0
    %332 = vmatpush2.msra.mxu0 0.0
    %333 = vmatprep.subr.mxu0 0.0
    %334 = vmatpush2.msra.mxu0 0.0
    %335 = vmatprep.subr.mxu0 0.0
    %336 = vmatpush2.msra.mxu0 0.0
    %337 = vmatprep.subr.mxu0 0.0
    %338 = vmatpush2.msra.mxu0 0.0
    %339 = vmatprep.subr.mxu0 0.0
    %340 = vmatpush2.msra.mxu0 0.0
    %341 = vmatprep.subr.mxu0 0.0
    %342 = vmatpush2.msra.mxu0 0.0
    %343 = vmatprep.subr.mxu0 0.0
    %344 = vmatpush2.msra.mxu0 0.0
    %345 = vmatprep.subr.mxu0 0.0
    %346 = vmatpush2.msra.mxu0 0.0
    %347 = vmatprep.subr.mxu0 0.0
    %348 = vmatpush2.msra.mxu0 0.0
    %349 = vmatprep.subr.mxu0 0.0
    %350 = vmatpush2.msra.mxu0 0.0
    %351 = vmatprep.mubr.f32.mxu0 0.0
    %352 = vmatmul.mubr.f32.gmra.mxu0 %v285
    %v353 = vpop.f32.mrf.mxu0
    %v354 = vadd.f32 %v276, %v353
    %v355 = vpop.f32.mrf.mxu0
    %356 = vdwg.mxu0
    %357 = vmatprep.subr.mxu0 0.0
    %358 = vmatpush1.msra.mxu0 0.0
    %359 = vmatprep.subr.mxu0 0.0
    %360 = vmatpush1.msra.mxu0 0.0
    %361 = vmatprep.subr.mxu0 0.0
    %362 = vmatpush1.msra.mxu0 0.0
    %363 = vmatprep.subr.mxu0 0.0
    %364 = vmatpush1.msra.mxu0 0.0
    %365 = vmatprep.subr.mxu0 0.0
    %366 = vmatpush1.msra.mxu0 0.0
    %367 = vmatprep.subr.mxu0 0.0
    %368 = vmatpush1.msra.mxu0 0.0
    %369 = vmatprep.subr.mxu0 0.0
    %370 = vmatpush1.msra.mxu0 0.0
    %371 = vmatprep.subr.mxu0 0.0
    %372 = vmatpush1.msra.mxu0 0.0
    %373 = vmatprep.subr.mxu0 0.0
    %374 = vmatpush1.msra.mxu0 0.0
    %375 = vmatprep.subr.mxu0 0.0
    %376 = vmatpush1.msra.mxu0 0.0
    %377 = vmatprep.subr.mxu0 0.0
    %378 = vmatpush1.msra.mxu0 0.0
    %379 = vmatprep.subr.mxu0 0.0
    %380 = vmatpush1.msra.mxu0 0.0
    %381 = vmatprep.subr.mxu0 0.0
    %382 = vmatpush1.msra.mxu0 %v139
    %383 = vmatprep.subr.mxu0 0.0
    %384 = vmatpush1.msra.mxu0 %v138
    %385 = vmatprep.subr.mxu0 0.0
    %386 = vmatpush1.msra.mxu0 %v137
    %387 = vmatprep.subr.mxu0 0.0
    %388 = vmatpush1.msra.mxu0 %v136
    %389 = vmatprep.subr.mxu0 0.0
    %390 = vmatpush2.msra.mxu0 0.0
    %391 = vmatprep.subr.mxu0 0.0
    %392 = vmatpush2.msra.mxu0 0.0
    %393 = vmatprep.subr.mxu0 0.0
    %394 = vmatpush2.msra.mxu0 0.0
    %395 = vmatprep.subr.mxu0 0.0
    %396 = vmatpush2.msra.mxu0 0.0
    %397 = vmatprep.subr.mxu0 0.0
    %398 = vmatpush2.msra.mxu0 0.0
    %399 = vmatprep.subr.mxu0 0.0
    %400 = vmatpush2.msra.mxu0 0.0
    %401 = vmatprep.subr.mxu0 0.0
    %402 = vmatpush2.msra.mxu0 0.0
    %403 = vmatprep.subr.mxu0 0.0
    %404 = vmatpush2.msra.mxu0 0.0
    %405 = vmatprep.subr.mxu0 0.0
    %406 = vmatpush2.msra.mxu0 0.0
    %407 = vmatprep.subr.mxu0 0.0
    %408 = vmatpush2.msra.mxu0 0.0
    %409 = vmatprep.subr.mxu0 0.0
    %410 = vmatpush2.msra.mxu0 0.0
    %411 = vmatprep.subr.mxu0 0.0
    %412 = vmatpush2.msra.mxu0 0.0
    %413 = vmatprep.subr.mxu0 0.0
    %414 = vmatpush2.msra.mxu0 0.0
    %415 = vmatprep.subr.mxu0 0.0
    %416 = vmatpush2.msra.mxu0 0.0
    %417 = vmatprep.subr.mxu0 0.0
    %418 = vmatpush2.msra.mxu0 0.0
    %419 = vmatprep.subr.mxu0 0.0
    %420 = vmatpush2.msra.mxu0 0.0
    %421 = vmatprep.mubr.f32.mxu0 0.0
    %422 = vmatmul.mubr.f32.gmra.mxu0 %v285
    %v423 = vpop.f32.mrf.mxu0
    %v424 = vadd.f32 0.0, %v423
    %v425 = vpop.f32.mrf.mxu0
    %426 = vdwg.mxu0
    %v428 = vrot.slane %v424, 7
    %v431 = vadd.f32 %v128, %v428
    %v432 = vadd.f32 %v133, %v424
    %v433 = vxor.u32 %v431, 2147483648
    %v434 = vxor.u32 %v432, 2147483648
    %v435 = vmul.f32 %v433, 1.442695
    %v436 = vpow.pop %v435
    %v437 = vmul.f32 %v434, 1.442695
    %v438 = vpow.pop %v437
    %v439 = vadd.f32 %v436, 1.0
    %v440 = vadd.f32 %v438, 1.0
    %v441 = vrcp.pop %v439
    %v442 = vmul.f32 1.0, %v441
    %v443 = vrcp.pop %v440
    %v444 = vmul.f32 1.0, %v443
    %v445 = vtanh.pop %v431
    %v446 = vtanh.pop %v432
    %v449 = vrot.slane %v258, 7
    %v450 = vrot.slane %v259, 7
    %v453 = vmul.f32 %v442, %v449
    %v454 = vmul.f32 %v444, %v450
    %457 = vrot.lane.b32.xlu0 %v445, 32
    %v458 = vpop.permute.xlu0 %457
    %459 = vrot.lane.b32.xlu0 %v446, 32
    %v460 = vpop.permute.xlu0 %459
    %v463 = vmul.f32 %v442, %v458
    %v464 = vmul.f32 %v444, %v460
    %467 = vrot.lane.b32.xlu0 %v463, 32
    %v468 = vpop.permute.xlu0 %467
    %469 = vrot.lane.b32.xlu0 %v464, 32
    %v470 = vpop.permute.xlu0 %469
    %v473 = vadd.f32 %v453, %v468
    %v474 = vadd.f32 %v454, %v470
    %v475 = vtanh.pop %v473
    %v476 = vtanh.pop %v474
    %479 = vrot.lane.b32.xlu0 %v475, 32
    %v480 = vpop.permute.xlu0 %479
    %481 = vrot.lane.b32.xlu0 %v476, 32
    %v482 = vpop.permute.xlu0 %481
    %v485 = vmul.f32 %v442, %v480
    %v486 = vmul.f32 %v444, %v482
    %v489 = vrot.slane %v485, 1
    %v490 = vsel %vm281, %v486, %v489
    %491 = vrot.lane.b32.xlu0 %v490, 64
    %v492 = vpop.permute.xlu0 %491
    %v493 = vsel %vm54, %v492, 0
    %495 = vmatprep.subr.mxu0 0.0
    %496 = vmatpush1.msra.mxu0 0.0
    %497 = vmatprep.subr.mxu0 0.0
    %498 = vmatpush1.msra.mxu0 0.0
    %499 = vmatprep.subr.mxu0 0.0
    %500 = vmatpush1.msra.mxu0 0.0
    %501 = vmatprep.subr.mxu0 0.0
    %502 = vmatpush1.msra.mxu0 0.0
    %503 = vmatprep.subr.mxu0 0.0
    %504 = vmatpush1.msra.mxu0 0.0
    %505 = vmatprep.subr.mxu0 0.0
    %506 = vmatpush1.msra.mxu0 0.0
    %507 = vmatprep.subr.mxu0 0.0
    %508 = vmatpush1.msra.mxu0 0.0
    %509 = vmatprep.subr.mxu0 0.0
    %510 = vmatpush1.msra.mxu0 0.0
    %511 = vmatprep.subr.mxu0 0.0
    %512 = vmatpush1.msra.mxu0 0.0
    %513 = vmatprep.subr.mxu0 0.0
    %514 = vmatpush1.msra.mxu0 0.0
    %515 = vmatprep.subr.mxu0 0.0
    %516 = vmatpush1.msra.mxu0 0.0
    %517 = vmatprep.subr.mxu0 0.0
    %518 = vmatpush1.msra.mxu0 0.0
    %519 = vmatprep.subr.mxu0 0.0
    %520 = vmatpush1.msra.mxu0 %v143
    %521 = vmatprep.subr.mxu0 0.0
    %522 = vmatpush1.msra.mxu0 %v142
    %523 = vmatprep.subr.mxu0 0.0
    %524 = vmatpush1.msra.mxu0 %v141
    %525 = vmatprep.subr.mxu0 0.0
    %526 = vmatpush1.msra.mxu0 %v140
    %527 = vmatprep.subr.mxu0 0.0
    %528 = vmatpush2.msra.mxu0 0.0
    %529 = vmatprep.subr.mxu0 0.0
    %530 = vmatpush2.msra.mxu0 0.0
    %531 = vmatprep.subr.mxu0 0.0
    %532 = vmatpush2.msra.mxu0 0.0
    %533 = vmatprep.subr.mxu0 0.0
    %534 = vmatpush2.msra.mxu0 0.0
    %535 = vmatprep.subr.mxu0 0.0
    %536 = vmatpush2.msra.mxu0 0.0
    %537 = vmatprep.subr.mxu0 0.0
    %538 = vmatpush2.msra.mxu0 0.0
    %539 = vmatprep.subr.mxu0 0.0
    %540 = vmatpush2.msra.mxu0 0.0
    %541 = vmatprep.subr.mxu0 0.0
    %542 = vmatpush2.msra.mxu0 0.0
    %543 = vmatprep.subr.mxu0 0.0
    %544 = vmatpush2.msra.mxu0 0.0
    %545 = vmatprep.subr.mxu0 0.0
    %546 = vmatpush2.msra.mxu0 0.0
    %547 = vmatprep.subr.mxu0 0.0
    %548 = vmatpush2.msra.mxu0 0.0
    %549 = vmatprep.subr.mxu0 0.0
    %550 = vmatpush2.msra.mxu0 0.0
    %551 = vmatprep.subr.mxu0 0.0
    %552 = vmatpush2.msra.mxu0 0.0
    %553 = vmatprep.subr.mxu0 0.0
    %554 = vmatpush2.msra.mxu0 0.0
    %555 = vmatprep.subr.mxu0 0.0
    %556 = vmatpush2.msra.mxu0 0.0
    %557 = vmatprep.subr.mxu0 0.0
    %558 = vmatpush2.msra.mxu0 0.0
    %559 = vmatprep.mubr.f32.mxu0 0.0
    %560 = vmatmul.mubr.f32.gmra.mxu0 %v493
    %v561 = vpop.f32.mrf.mxu0
    %v562 = vadd.f32 %v276, %v561
    %v563 = vpop.f32.mrf.mxu0
    %564 = vdwg.mxu0
    %565 = vmatprep.subr.mxu0 0.0
    %566 = vmatpush1.msra.mxu0 0.0
    %567 = vmatprep.subr.mxu0 0.0
    %568 = vmatpush1.msra.mxu0 0.0
    %569 = vmatprep.subr.mxu0 0.0
    %570 = vmatpush1.msra.mxu0 0.0
    %571 = vmatprep.subr.mxu0 0.0
    %572 = vmatpush1.msra.mxu0 0.0
    %573 = vmatprep.subr.mxu0 0.0
    %574 = vmatpush1.msra.mxu0 0.0
    %575 = vmatprep.subr.mxu0 0.0
    %576 = vmatpush1.msra.mxu0 0.0
    %577 = vmatprep.subr.mxu0 0.0
    %578 = vmatpush1.msra.mxu0 0.0
    %579 = vmatprep.subr.mxu0 0.0
    %580 = vmatpush1.msra.mxu0 0.0
    %581 = vmatprep.subr.mxu0 0.0
    %582 = vmatpush1.msra.mxu0 0.0
    %583 = vmatprep.subr.mxu0 0.0
    %584 = vmatpush1.msra.mxu0 0.0
    %585 = vmatprep.subr.mxu0 0.0
    %586 = vmatpush1.msra.mxu0 0.0
    %587 = vmatprep.subr.mxu0 0.0
    %588 = vmatpush1.msra.mxu0 0.0
    %589 = vmatprep.subr.mxu0 0.0
    %590 = vmatpush1.msra.mxu0 %v139
    %591 = vmatprep.subr.mxu0 0.0
    %592 = vmatpush1.msra.mxu0 %v138
    %593 = vmatprep.subr.mxu0 0.0
    %594 = vmatpush1.msra.mxu0 %v137
    %595 = vmatprep.subr.mxu0 0.0
    %596 = vmatpush1.msra.mxu0 %v136
    %597 = vmatprep.subr.mxu0 0.0
    %598 = vmatpush2.msra.mxu0 0.0
    %599 = vmatprep.subr.mxu0 0.0
    %600 = vmatpush2.msra.mxu0 0.0
    %601 = vmatprep.subr.mxu0 0.0
    %602 = vmatpush2.msra.mxu0 0.0
    %603 = vmatprep.subr.mxu0 0.0
    %604 = vmatpush2.msra.mxu0 0.0
    %605 = vmatprep.subr.mxu0 0.0
    %606 = vmatpush2.msra.mxu0 0.0
    %607 = vmatprep.subr.mxu0 0.0
    %608 = vmatpush2.msra.mxu0 0.0
    %609 = vmatprep.subr.mxu0 0.0
    %610 = vmatpush2.msra.mxu0 0.0
    %611 = vmatprep.subr.mxu0 0.0
    %612 = vmatpush2.msra.mxu0 0.0
    %613 = vmatprep.subr.mxu0 0.0
    %614 = vmatpush2.msra.mxu0 0.0
    %615 = vmatprep.subr.mxu0 0.0
    %616 = vmatpush2.msra.mxu0 0.0
    %617 = vmatprep.subr.mxu0 0.0
    %618 = vmatpush2.msra.mxu0 0.0
    %619 = vmatprep.subr.mxu0 0.0
    %620 = vmatpush2.msra.mxu0 0.0
    %621 = vmatprep.subr.mxu0 0.0
    %622 = vmatpush2.msra.mxu0 0.0
    %623 = vmatprep.subr.mxu0 0.0
    %624 = vmatpush2.msra.mxu0 0.0
    %625 = vmatprep.subr.mxu0 0.0
    %626 = vmatpush2.msra.mxu0 0.0
    %627 = vmatprep.subr.mxu0 0.0
    %628 = vmatpush2.msra.mxu0 0.0
    %629 = vmatprep.mubr.f32.mxu0 0.0
    %630 = vmatmul.mubr.f32.gmra.mxu0 %v493
    %v631 = vpop.f32.mrf.mxu0
    %v632 = vadd.f32 0.0, %v631
    %v633 = vpop.f32.mrf.mxu0
    %634 = vdwg.mxu0
    %v636 = vrot.slane %v632, 6
    %v637 = vrot.slane %v632, 7
    %v640 = vadd.f32 %v128, %v636
    %v641 = vadd.f32 %v133, %v637
    %v642 = vxor.u32 %v640, 2147483648
    %v643 = vxor.u32 %v641, 2147483648
    %v644 = vmul.f32 %v642, 1.442695
    %v645 = vpow.pop %v644
    %v646 = vmul.f32 %v643, 1.442695
    %v647 = vpow.pop %v646
    %v648 = vadd.f32 %v645, 1.0
    %v649 = vadd.f32 %v647, 1.0
    %v650 = vrcp.pop %v648
    %v651 = vmul.f32 1.0, %v650
    %v652 = vrcp.pop %v649
    %v653 = vmul.f32 1.0, %v652
    %v654 = vtanh.pop %v640
    %v655 = vtanh.pop %v641
    %v658 = vrot.slane %v473, 7
    %v659 = vrot.slane %v474, 7
    %v662 = vmul.f32 %v651, %v658
    %v663 = vmul.f32 %v653, %v659
    %666 = vrot.lane.b32.xlu0 %v654, 32
    %v667 = vpop.permute.xlu0 %666
    %668 = vrot.lane.b32.xlu0 %v655, 32
    %v669 = vpop.permute.xlu0 %668
    %v672 = vmul.f32 %v651, %v667
    %v673 = vmul.f32 %v653, %v669
    %676 = vrot.lane.b32.xlu0 %v672, 32
    %v677 = vpop.permute.xlu0 %676
    %678 = vrot.lane.b32.xlu0 %v673, 32
    %v679 = vpop.permute.xlu0 %678
    %v682 = vadd.f32 %v662, %v677
    %v683 = vadd.f32 %v663, %v679
    %v684 = vtanh.pop %v682
    %v685 = vtanh.pop %v683
    %688 = vrot.lane.b32.xlu0 %v684, 32
    %v689 = vpop.permute.xlu0 %688
    %690 = vrot.lane.b32.xlu0 %v685, 32
    %v691 = vpop.permute.xlu0 %690
    %v694 = vmul.f32 %v651, %v689
    %v695 = vmul.f32 %v653, %v691
    %v698 = vrot.slane %v694, 2
    %v699 = vrot.slane %v695, 1
    %v700 = vsel %vm281, %v699, %v698
    %701 = vrot.lane.b32.xlu0 %v700, 64
    %v702 = vpop.permute.xlu0 %701
    %v703 = vsel %vm54, %v702, 0
    %705 = vmatprep.subr.mxu0 0.0
    %706 = vmatpush1.msra.mxu0 0.0
    %707 = vmatprep.subr.mxu0 0.0
    %708 = vmatpush1.msra.mxu0 0.0
    %709 = vmatprep.subr.mxu0 0.0
    %710 = vmatpush1.msra.mxu0 0.0
    %711 = vmatprep.subr.mxu0 0.0
    %712 = vmatpush1.msra.mxu0 0.0
    %713 = vmatprep.subr.mxu0 0.0
    %714 = vmatpush1.msra.mxu0 0.0
    %715 = vmatprep.subr.mxu0 0.0
    %716 = vmatpush1.msra.mxu0 0.0
    %717 = vmatprep.subr.mxu0 0.0
    %718 = vmatpush1.msra.mxu0 0.0
    %719 = vmatprep.subr.mxu0 0.0
    %720 = vmatpush1.msra.mxu0 0.0
    %721 = vmatprep.subr.mxu0 0.0
    %722 = vmatpush1.msra.mxu0 0.0
    %723 = vmatprep.subr.mxu0 0.0
    %724 = vmatpush1.msra.mxu0 0.0
    %725 = vmatprep.subr.mxu0 0.0
    %726 = vmatpush1.msra.mxu0 0.0
    %727 = vmatprep.subr.mxu0 0.0
    %728 = vmatpush1.msra.mxu0 0.0
    %729 = vmatprep.subr.mxu0 0.0
    %730 = vmatpush1.msra.mxu0 %v143
    %731 = vmatprep.subr.mxu0 0.0
    %732 = vmatpush1.msra.mxu0 %v142
    %733 = vmatprep.subr.mxu0 0.0
    %734 = vmatpush1.msra.mxu0 %v141
    %735 = vmatprep.subr.mxu0 0.0
    %736 = vmatpush1.msra.mxu0 %v140
    %737 = vmatprep.subr.mxu0 0.0
    %738 = vmatpush2.msra.mxu0 0.0
    %739 = vmatprep.subr.mxu0 0.0
    %740 = vmatpush2.msra.mxu0 0.0
    %741 = vmatprep.subr.mxu0 0.0
    %742 = vmatpush2.msra.mxu0 0.0
    %743 = vmatprep.subr.mxu0 0.0
    %744 = vmatpush2.msra.mxu0 0.0
    %745 = vmatprep.subr.mxu0 0.0
    %746 = vmatpush2.msra.mxu0 0.0
    %747 = vmatprep.subr.mxu0 0.0
    %748 = vmatpush2.msra.mxu0 0.0
    %749 = vmatprep.subr.mxu0 0.0
    %750 = vmatpush2.msra.mxu0 0.0
    %751 = vmatprep.subr.mxu0 0.0
    %752 = vmatpush2.msra.mxu0 0.0
    %753 = vmatprep.subr.mxu0 0.0
    %754 = vmatpush2.msra.mxu0 0.0
    %755 = vmatprep.subr.mxu0 0.0
    %756 = vmatpush2.msra.mxu0 0.0
    %757 = vmatprep.subr.mxu0 0.0
    %758 = vmatpush2.msra.mxu0 0.0
    %759 = vmatprep.subr.mxu0 0.0
    %760 = vmatpush2.msra.mxu0 0.0
    %761 = vmatprep.subr.mxu0 0.0
    %762 = vmatpush2.msra.mxu0 0.0
    %763 = vmatprep.subr.mxu0 0.0
    %764 = vmatpush2.msra.mxu0 0.0
    %765 = vmatprep.subr.mxu0 0.0
    %766 = vmatpush2.msra.mxu0 0.0
    %767 = vmatprep.subr.mxu0 0.0
    %768 = vmatpush2.msra.mxu0 0.0
    %769 = vmatprep.mubr.f32.mxu0 0.0
    %770 = vmatmul.mubr.f32.gmra.mxu0 %v703
    %v771 = vpop.f32.mrf.mxu0
    %v772 = vadd.f32 %v276, %v771
    %v773 = vpop.f32.mrf.mxu0
    %774 = vdwg.mxu0
    %775 = vmatprep.subr.mxu0 0.0
    %776 = vmatpush1.msra.mxu0 0.0
    %777 = vmatprep.subr.mxu0 0.0
    %778 = vmatpush1.msra.mxu0 0.0
    %779 = vmatprep.subr.mxu0 0.0
    %780 = vmatpush1.msra.mxu0 0.0
    %781 = vmatprep.subr.mxu0 0.0
    %782 = vmatpush1.msra.mxu0 0.0
    %783 = vmatprep.subr.mxu0 0.0
    %784 = vmatpush1.msra.mxu0 0.0
    %785 = vmatprep.subr.mxu0 0.0
    %786 = vmatpush1.msra.mxu0 0.0
    %787 = vmatprep.subr.mxu0 0.0
    %788 = vmatpush1.msra.mxu0 0.0
    %789 = vmatprep.subr.mxu0 0.0
    %790 = vmatpush1.msra.mxu0 0.0
    %791 = vmatprep.subr.mxu0 0.0
    %792 = vmatpush1.msra.mxu0 0.0
    %793 = vmatprep.subr.mxu0 0.0
    %794 = vmatpush1.msra.mxu0 0.0
    %795 = vmatprep.subr.mxu0 0.0
    %796 = vmatpush1.msra.mxu0 0.0
    %797 = vmatprep.subr.mxu0 0.0
    %798 = vmatpush1.msra.mxu0 0.0
    %799 = vmatprep.subr.mxu0 0.0
    %800 = vmatpush1.msra.mxu0 %v139
    %801 = vmatprep.subr.mxu0 0.0
    %802 = vmatpush1.msra.mxu0 %v138
    %803 = vmatprep.subr.mxu0 0.0
    %804 = vmatpush1.msra.mxu0 %v137
    %805 = vmatprep.subr.mxu0 0.0
    %806 = vmatpush1.msra.mxu0 %v136
    %807 = vmatprep.subr.mxu0 0.0
    %808 = vmatpush2.msra.mxu0 0.0
    %809 = vmatprep.subr.mxu0 0.0
    %810 = vmatpush2.msra.mxu0 0.0
    %811 = vmatprep.subr.mxu0 0.0
    %812 = vmatpush2.msra.mxu0 0.0
    %813 = vmatprep.subr.mxu0 0.0
    %814 = vmatpush2.msra.mxu0 0.0
    %815 = vmatprep.subr.mxu0 0.0
    %816 = vmatpush2.msra.mxu0 0.0
    %817 = vmatprep.subr.mxu0 0.0
    %818 = vmatpush2.msra.mxu0 0.0
    %819 = vmatprep.subr.mxu0 0.0
    %820 = vmatpush2.msra.mxu0 0.0
    %821 = vmatprep.subr.mxu0 0.0
    %822 = vmatpush2.msra.mxu0 0.0
    %823 = vmatprep.subr.mxu0 0.0
    %824 = vmatpush2.msra.mxu0 0.0
    %825 = vmatprep.subr.mxu0 0.0
    %826 = vmatpush2.msra.mxu0 0.0
    %827 = vmatprep.subr.mxu0 0.0
    %828 = vmatpush2.msra.mxu0 0.0
    %829 = vmatprep.subr.mxu0 0.0
    %830 = vmatpush2.msra.mxu0 0.0
    %831 = vmatprep.subr.mxu0 0.0
    %832 = vmatpush2.msra.mxu0 0.0
    %833 = vmatprep.subr.mxu0 0.0
    %834 = vmatpush2.msra.mxu0 0.0
    %835 = vmatprep.subr.mxu0 0.0
    %836 = vmatpush2.msra.mxu0 0.0
    %837 = vmatprep.subr.mxu0 0.0
    %838 = vmatpush2.msra.mxu0 0.0
    %839 = vmatprep.mubr.f32.mxu0 0.0
    %840 = vmatmul.mubr.f32.gmra.mxu0 %v703
    %v841 = vpop.f32.mrf.mxu0
    %v842 = vadd.f32 0.0, %v841
    %v843 = vpop.f32.mrf.mxu0
    %844 = vdwg.mxu0
    %v846 = vrot.slane %v842, 5
    %v847 = vrot.slane %v842, 6
    %v850 = vadd.f32 %v128, %v846
    %v851 = vadd.f32 %v133, %v847
    %v852 = vxor.u32 %v850, 2147483648
    %v853 = vxor.u32 %v851, 2147483648
    %v854 = vmul.f32 %v852, 1.442695
    %v855 = vpow.pop %v854
    %v856 = vmul.f32 %v853, 1.442695
    %v857 = vpow.pop %v856
    %v858 = vadd.f32 %v855, 1.0
    %v859 = vadd.f32 %v857, 1.0
    %v860 = vrcp.pop %v858
    %v861 = vmul.f32 1.0, %v860
    %v862 = vrcp.pop %v859
    %v863 = vmul.f32 1.0, %v862
    %v864 = vtanh.pop %v850
    %v865 = vtanh.pop %v851
    %v868 = vrot.slane %v682, 7
    %v869 = vrot.slane %v683, 7
    %v872 = vmul.f32 %v861, %v868
    %v873 = vmul.f32 %v863, %v869
    %876 = vrot.lane.b32.xlu0 %v864, 32
    %v877 = vpop.permute.xlu0 %876
    %878 = vrot.lane.b32.xlu0 %v865, 32
    %v879 = vpop.permute.xlu0 %878
    %v882 = vmul.f32 %v861, %v877
    %v883 = vmul.f32 %v863, %v879
    %886 = vrot.lane.b32.xlu0 %v882, 32
    %v887 = vpop.permute.xlu0 %886
    %888 = vrot.lane.b32.xlu0 %v883, 32
    %v889 = vpop.permute.xlu0 %888
    %v892 = vadd.f32 %v872, %v887
    %v893 = vadd.f32 %v873, %v889
    %v894 = vtanh.pop %v892
    %v895 = vtanh.pop %v893
    %898 = vrot.lane.b32.xlu0 %v894, 32
    %v899 = vpop.permute.xlu0 %898
    %900 = vrot.lane.b32.xlu0 %v895, 32
    %v901 = vpop.permute.xlu0 %900
    %v904 = vmul.f32 %v861, %v899
    %v905 = vmul.f32 %v863, %v901
    %v908 = vrot.slane %v904, 3
    %v909 = vrot.slane %v905, 2
    %v910 = vsel %vm281, %v909, %v908
    %911 = vrot.lane.b32.xlu0 %v910, 64
    %v912 = vpop.permute.xlu0 %911
    %v913 = vsel %vm54, %v912, 0
    %915 = vmatprep.subr.mxu0 0.0
    %916 = vmatpush1.msra.mxu0 0.0
    %917 = vmatprep.subr.mxu0 0.0
    %918 = vmatpush1.msra.mxu0 0.0
    %919 = vmatprep.subr.mxu0 0.0
    %920 = vmatpush1.msra.mxu0 0.0
    %921 = vmatprep.subr.mxu0 0.0
    %922 = vmatpush1.msra.mxu0 0.0
    %923 = vmatprep.subr.mxu0 0.0
    %924 = vmatpush1.msra.mxu0 0.0
    %925 = vmatprep.subr.mxu0 0.0
    %926 = vmatpush1.msra.mxu0 0.0
    %927 = vmatprep.subr.mxu0 0.0
    %928 = vmatpush1.msra.mxu0 0.0
    %929 = vmatprep.subr.mxu0 0.0
    %930 = vmatpush1.msra.mxu0 0.0
    %931 = vmatprep.subr.mxu0 0.0
    %932 = vmatpush1.msra.mxu0 0.0
    %933 = vmatprep.subr.mxu0 0.0
    %934 = vmatpush1.msra.mxu0 0.0
    %935 = vmatprep.subr.mxu0 0.0
    %936 = vmatpush1.msra.mxu0 0.0
    %937 = vmatprep.subr.mxu0 0.0
    %938 = vmatpush1.msra.mxu0 0.0
    %939 = vmatprep.subr.mxu0 0.0
    %940 = vmatpush1.msra.mxu0 %v143
    %941 = vmatprep.subr.mxu0 0.0
    %942 = vmatpush1.msra.mxu0 %v142
    %943 = vmatprep.subr.mxu0 0.0
    %944 = vmatpush1.msra.mxu0 %v141
    %945 = vmatprep.subr.mxu0 0.0
    %946 = vmatpush1.msra.mxu0 %v140
    %947 = vmatprep.subr.mxu0 0.0
    %948 = vmatpush2.msra.mxu0 0.0
    %949 = vmatprep.subr.mxu0 0.0
    %950 = vmatpush2.msra.mxu0 0.0
    %951 = vmatprep.subr.mxu0 0.0
    %952 = vmatpush2.msra.mxu0 0.0
    %953 = vmatprep.subr.mxu0 0.0
    %954 = vmatpush2.msra.mxu0 0.0
    %955 = vmatprep.subr.mxu0 0.0
    %956 = vmatpush2.msra.mxu0 0.0
    %957 = vmatprep.subr.mxu0 0.0
    %958 = vmatpush2.msra.mxu0 0.0
    %959 = vmatprep.subr.mxu0 0.0
    %960 = vmatpush2.msra.mxu0 0.0
    %961 = vmatprep.subr.mxu0 0.0
    %962 = vmatpush2.msra.mxu0 0.0
    %963 = vmatprep.subr.mxu0 0.0
    %964 = vmatpush2.msra.mxu0 0.0
    %965 = vmatprep.subr.mxu0 0.0
    %966 = vmatpush2.msra.mxu0 0.0
    %967 = vmatprep.subr.mxu0 0.0
    %968 = vmatpush2.msra.mxu0 0.0
    %969 = vmatprep.subr.mxu0 0.0
    %970 = vmatpush2.msra.mxu0 0.0
    %971 = vmatprep.subr.mxu0 0.0
    %972 = vmatpush2.msra.mxu0 0.0
    %973 = vmatprep.subr.mxu0 0.0
    %974 = vmatpush2.msra.mxu0 0.0
    %975 = vmatprep.subr.mxu0 0.0
    %976 = vmatpush2.msra.mxu0 0.0
    %977 = vmatprep.subr.mxu0 0.0
    %978 = vmatpush2.msra.mxu0 0.0
    %979 = vmatprep.mubr.f32.mxu0 0.0
    %980 = vmatmul.mubr.f32.gmra.mxu0 %v913
    %v981 = vpop.f32.mrf.mxu0
    %v982 = vadd.f32 %v276, %v981
    %v983 = vpop.f32.mrf.mxu0
    %984 = vdwg.mxu0
    %985 = vmatprep.subr.mxu0 0.0
    %986 = vmatpush1.msra.mxu0 0.0
    %987 = vmatprep.subr.mxu0 0.0
    %988 = vmatpush1.msra.mxu0 0.0
    %989 = vmatprep.subr.mxu0 0.0
    %990 = vmatpush1.msra.mxu0 0.0
    %991 = vmatprep.subr.mxu0 0.0
    %992 = vmatpush1.msra.mxu0 0.0
    %993 = vmatprep.subr.mxu0 0.0
    %994 = vmatpush1.msra.mxu0 0.0
    %995 = vmatprep.subr.mxu0 0.0
    %996 = vmatpush1.msra.mxu0 0.0
    %997 = vmatprep.subr.mxu0 0.0
    %998 = vmatpush1.msra.mxu0 0.0
    %999 = vmatprep.subr.mxu0 0.0
    %1000 = vmatpush1.msra.mxu0 0.0
    %1001 = vmatprep.subr.mxu0 0.0
    %1002 = vmatpush1.msra.mxu0 0.0
    %1003 = vmatprep.subr.mxu0 0.0
    %1004 = vmatpush1.msra.mxu0 0.0
    %1005 = vmatprep.subr.mxu0 0.0
    %1006 = vmatpush1.msra.mxu0 0.0
    %1007 = vmatprep.subr.mxu0 0.0
    %1008 = vmatpush1.msra.mxu0 0.0
    %1009 = vmatprep.subr.mxu0 0.0
    %1010 = vmatpush1.msra.mxu0 %v139
    %1011 = vmatprep.subr.mxu0 0.0
    %1012 = vmatpush1.msra.mxu0 %v138
    %1013 = vmatprep.subr.mxu0 0.0
    %1014 = vmatpush1.msra.mxu0 %v137
    %1015 = vmatprep.subr.mxu0 0.0
    %1016 = vmatpush1.msra.mxu0 %v136
    %1017 = vmatprep.subr.mxu0 0.0
    %1018 = vmatpush2.msra.mxu0 0.0
    %1019 = vmatprep.subr.mxu0 0.0
    %1020 = vmatpush2.msra.mxu0 0.0
    %1021 = vmatprep.subr.mxu0 0.0
    %1022 = vmatpush2.msra.mxu0 0.0
    %1023 = vmatprep.subr.mxu0 0.0
    %1024 = vmatpush2.msra.mxu0 0.0
    %1025 = vmatprep.subr.mxu0 0.0
    %1026 = vmatpush2.msra.mxu0 0.0
    %1027 = vmatprep.subr.mxu0 0.0
    %1028 = vmatpush2.msra.mxu0 0.0
    %1029 = vmatprep.subr.mxu0 0.0
    %1030 = vmatpush2.msra.mxu0 0.0
    %1031 = vmatprep.subr.mxu0 0.0
    %1032 = vmatpush2.msra.mxu0 0.0
    %1033 = vmatprep.subr.mxu0 0.0
    %1034 = vmatpush2.msra.mxu0 0.0
    %1035 = vmatprep.subr.mxu0 0.0
    %1036 = vmatpush2.msra.mxu0 0.0
    %1037 = vmatprep.subr.mxu0 0.0
    %1038 = vmatpush2.msra.mxu0 0.0
    %1039 = vmatprep.subr.mxu0 0.0
    %1040 = vmatpush2.msra.mxu0 0.0
    %1041 = vmatprep.subr.mxu0 0.0
    %1042 = vmatpush2.msra.mxu0 0.0
    %1043 = vmatprep.subr.mxu0 0.0
    %1044 = vmatpush2.msra.mxu0 0.0
    %1045 = vmatprep.subr.mxu0 0.0
    %1046 = vmatpush2.msra.mxu0 0.0
    %1047 = vmatprep.subr.mxu0 0.0
    %1048 = vmatpush2.msra.mxu0 0.0
    %1049 = vmatprep.mubr.f32.mxu0 0.0
    %1050 = vmatmul.mubr.f32.gmra.mxu0 %v913
    %v1051 = vpop.f32.mrf.mxu0
    %v1052 = vadd.f32 0.0, %v1051
    %v1053 = vpop.f32.mrf.mxu0
    %1054 = vdwg.mxu0
    %v1056 = vrot.slane %v1052, 4
    %v1057 = vrot.slane %v1052, 5
    %v1060 = vadd.f32 %v128, %v1056
    %v1061 = vadd.f32 %v133, %v1057
    %v1062 = vxor.u32 %v1060, 2147483648
    %v1063 = vxor.u32 %v1061, 2147483648
    %v1064 = vmul.f32 %v1062, 1.442695
    %v1065 = vpow.pop %v1064
    %v1066 = vmul.f32 %v1063, 1.442695
    %v1067 = vpow.pop %v1066
    %v1068 = vadd.f32 %v1065, 1.0
    %v1069 = vadd.f32 %v1067, 1.0
    %v1070 = vrcp.pop %v1068
    %v1071 = vmul.f32 1.0, %v1070
    %v1072 = vrcp.pop %v1069
    %v1073 = vmul.f32 1.0, %v1072
    %v1074 = vtanh.pop %v1060
    %v1075 = vtanh.pop %v1061
    %v1078 = vrot.slane %v892, 7
    %v1079 = vrot.slane %v893, 7
    %v1082 = vmul.f32 %v1071, %v1078
    %v1083 = vmul.f32 %v1073, %v1079
    %1086 = vrot.lane.b32.xlu0 %v1074, 32
    %v1087 = vpop.permute.xlu0 %1086
    %1088 = vrot.lane.b32.xlu0 %v1075, 32
    %v1089 = vpop.permute.xlu0 %1088
    %v1092 = vmul.f32 %v1071, %v1087
    %v1093 = vmul.f32 %v1073, %v1089
    %1096 = vrot.lane.b32.xlu0 %v1092, 32
    %v1097 = vpop.permute.xlu0 %1096
    %1098 = vrot.lane.b32.xlu0 %v1093, 32
    %v1099 = vpop.permute.xlu0 %1098
    %v1102 = vadd.f32 %v1082, %v1097
    %v1103 = vadd.f32 %v1083, %v1099
    %v1104 = vtanh.pop %v1102
    %v1105 = vtanh.pop %v1103
    %1108 = vrot.lane.b32.xlu0 %v1104, 32
    %v1109 = vpop.permute.xlu0 %1108
    %1110 = vrot.lane.b32.xlu0 %v1105, 32
    %v1111 = vpop.permute.xlu0 %1110
    %v1114 = vmul.f32 %v1071, %v1109
    %v1115 = vmul.f32 %v1073, %v1111
    %v1118 = vrot.slane %v1114, 4
    %v1119 = vrot.slane %v1115, 3
    %v1120 = vsel %vm281, %v1119, %v1118
    %1121 = vrot.lane.b32.xlu0 %v1120, 64
    %v1122 = vpop.permute.xlu0 %1121
    %v1123 = vsel %vm54, %v1122, 0
    %1125 = vmatprep.subr.mxu0 0.0
    %1126 = vmatpush1.msra.mxu0 0.0
    %1127 = vmatprep.subr.mxu0 0.0
    %1128 = vmatpush1.msra.mxu0 0.0
    %1129 = vmatprep.subr.mxu0 0.0
    %1130 = vmatpush1.msra.mxu0 0.0
    %1131 = vmatprep.subr.mxu0 0.0
    %1132 = vmatpush1.msra.mxu0 0.0
    %1133 = vmatprep.subr.mxu0 0.0
    %1134 = vmatpush1.msra.mxu0 0.0
    %1135 = vmatprep.subr.mxu0 0.0
    %1136 = vmatpush1.msra.mxu0 0.0
    %1137 = vmatprep.subr.mxu0 0.0
    %1138 = vmatpush1.msra.mxu0 0.0
    %1139 = vmatprep.subr.mxu0 0.0
    %1140 = vmatpush1.msra.mxu0 0.0
    %1141 = vmatprep.subr.mxu0 0.0
    %1142 = vmatpush1.msra.mxu0 0.0
    %1143 = vmatprep.subr.mxu0 0.0
    %1144 = vmatpush1.msra.mxu0 0.0
    %1145 = vmatprep.subr.mxu0 0.0
    %1146 = vmatpush1.msra.mxu0 0.0
    %1147 = vmatprep.subr.mxu0 0.0
    %1148 = vmatpush1.msra.mxu0 0.0
    %1149 = vmatprep.subr.mxu0 0.0
    %1150 = vmatpush1.msra.mxu0 %v143
    %1151 = vmatprep.subr.mxu0 0.0
    %1152 = vmatpush1.msra.mxu0 %v142
    %1153 = vmatprep.subr.mxu0 0.0
    %1154 = vmatpush1.msra.mxu0 %v141
    %1155 = vmatprep.subr.mxu0 0.0
    %1156 = vmatpush1.msra.mxu0 %v140
    %1157 = vmatprep.subr.mxu0 0.0
    %1158 = vmatpush2.msra.mxu0 0.0
    %1159 = vmatprep.subr.mxu0 0.0
    %1160 = vmatpush2.msra.mxu0 0.0
    %1161 = vmatprep.subr.mxu0 0.0
    %1162 = vmatpush2.msra.mxu0 0.0
    %1163 = vmatprep.subr.mxu0 0.0
    %1164 = vmatpush2.msra.mxu0 0.0
    %1165 = vmatprep.subr.mxu0 0.0
    %1166 = vmatpush2.msra.mxu0 0.0
    %1167 = vmatprep.subr.mxu0 0.0
    %1168 = vmatpush2.msra.mxu0 0.0
    %1169 = vmatprep.subr.mxu0 0.0
    %1170 = vmatpush2.msra.mxu0 0.0
    %1171 = vmatprep.subr.mxu0 0.0
    %1172 = vmatpush2.msra.mxu0 0.0
    %1173 = vmatprep.subr.mxu0 0.0
    %1174 = vmatpush2.msra.mxu0 0.0
    %1175 = vmatprep.subr.mxu0 0.0
    %1176 = vmatpush2.msra.mxu0 0.0
    %1177 = vmatprep.subr.mxu0 0.0
    %1178 = vmatpush2.msra.mxu0 0.0
    %1179 = vmatprep.subr.mxu0 0.0
    %1180 = vmatpush2.msra.mxu0 0.0
    %1181 = vmatprep.subr.mxu0 0.0
    %1182 = vmatpush2.msra.mxu0 0.0
    %1183 = vmatprep.subr.mxu0 0.0
    %1184 = vmatpush2.msra.mxu0 0.0
    %1185 = vmatprep.subr.mxu0 0.0
    %1186 = vmatpush2.msra.mxu0 0.0
    %1187 = vmatprep.subr.mxu0 0.0
    %1188 = vmatpush2.msra.mxu0 0.0
    %1189 = vmatprep.mubr.f32.mxu0 0.0
    %1190 = vmatmul.mubr.f32.gmra.mxu0 %v1123
    %v1191 = vpop.f32.mrf.mxu0
    %v1192 = vadd.f32 %v276, %v1191
    %v1193 = vpop.f32.mrf.mxu0
    %1194 = vdwg.mxu0
    %1195 = vmatprep.subr.mxu0 0.0
    %1196 = vmatpush1.msra.mxu0 0.0
    %1197 = vmatprep.subr.mxu0 0.0
    %1198 = vmatpush1.msra.mxu0 0.0
    %1199 = vmatprep.subr.mxu0 0.0
    %1200 = vmatpush1.msra.mxu0 0.0
    %1201 = vmatprep.subr.mxu0 0.0
    %1202 = vmatpush1.msra.mxu0 0.0
    %1203 = vmatprep.subr.mxu0 0.0
    %1204 = vmatpush1.msra.mxu0 0.0
    %1205 = vmatprep.subr.mxu0 0.0
    %1206 = vmatpush1.msra.mxu0 0.0
    %1207 = vmatprep.subr.mxu0 0.0
    %1208 = vmatpush1.msra.mxu0 0.0
    %1209 = vmatprep.subr.mxu0 0.0
    %1210 = vmatpush1.msra.mxu0 0.0
    %1211 = vmatprep.subr.mxu0 0.0
    %1212 = vmatpush1.msra.mxu0 0.0
    %1213 = vmatprep.subr.mxu0 0.0
    %1214 = vmatpush1.msra.mxu0 0.0
    %1215 = vmatprep.subr.mxu0 0.0
    %1216 = vmatpush1.msra.mxu0 0.0
    %1217 = vmatprep.subr.mxu0 0.0
    %1218 = vmatpush1.msra.mxu0 0.0
    %1219 = vmatprep.subr.mxu0 0.0
    %1220 = vmatpush1.msra.mxu0 %v139
    %1221 = vmatprep.subr.mxu0 0.0
    %1222 = vmatpush1.msra.mxu0 %v138
    %1223 = vmatprep.subr.mxu0 0.0
    %1224 = vmatpush1.msra.mxu0 %v137
    %1225 = vmatprep.subr.mxu0 0.0
    %1226 = vmatpush1.msra.mxu0 %v136
    %1227 = vmatprep.subr.mxu0 0.0
    %1228 = vmatpush2.msra.mxu0 0.0
    %1229 = vmatprep.subr.mxu0 0.0
    %1230 = vmatpush2.msra.mxu0 0.0
    %1231 = vmatprep.subr.mxu0 0.0
    %1232 = vmatpush2.msra.mxu0 0.0
    %1233 = vmatprep.subr.mxu0 0.0
    %1234 = vmatpush2.msra.mxu0 0.0
    %1235 = vmatprep.subr.mxu0 0.0
    %1236 = vmatpush2.msra.mxu0 0.0
    %1237 = vmatprep.subr.mxu0 0.0
    %1238 = vmatpush2.msra.mxu0 0.0
    %1239 = vmatprep.subr.mxu0 0.0
    %1240 = vmatpush2.msra.mxu0 0.0
    %1241 = vmatprep.subr.mxu0 0.0
    %1242 = vmatpush2.msra.mxu0 0.0
    %1243 = vmatprep.subr.mxu0 0.0
    %1244 = vmatpush2.msra.mxu0 0.0
    %1245 = vmatprep.subr.mxu0 0.0
    %1246 = vmatpush2.msra.mxu0 0.0
    %1247 = vmatprep.subr.mxu0 0.0
    %1248 = vmatpush2.msra.mxu0 0.0
    %1249 = vmatprep.subr.mxu0 0.0
    %1250 = vmatpush2.msra.mxu0 0.0
    %1251 = vmatprep.subr.mxu0 0.0
    %1252 = vmatpush2.msra.mxu0 0.0
    %1253 = vmatprep.subr.mxu0 0.0
    %1254 = vmatpush2.msra.mxu0 0.0
    %1255 = vmatprep.subr.mxu0 0.0
    %1256 = vmatpush2.msra.mxu0 0.0
    %1257 = vmatprep.subr.mxu0 0.0
    %1258 = vmatpush2.msra.mxu0 0.0
    %1259 = vmatprep.mubr.f32.mxu0 0.0
    %1260 = vmatmul.mubr.f32.gmra.mxu0 %v1123
    %v1261 = vpop.f32.mrf.mxu0
    %v1262 = vadd.f32 0.0, %v1261
    %v1263 = vpop.f32.mrf.mxu0
    %1264 = vdwg.mxu0
    %v1266 = vrot.slane %v1262, 3
    %v1267 = vrot.slane %v1262, 4
    %v1270 = vadd.f32 %v128, %v1266
    %v1271 = vadd.f32 %v133, %v1267
    %v1272 = vxor.u32 %v1270, 2147483648
    %v1273 = vxor.u32 %v1271, 2147483648
    %v1274 = vmul.f32 %v1272, 1.442695
    %v1275 = vpow.pop %v1274
    %v1276 = vmul.f32 %v1273, 1.442695
    %v1277 = vpow.pop %v1276
    %v1278 = vadd.f32 %v1275, 1.0
    %v1279 = vadd.f32 %v1277, 1.0
    %v1280 = vrcp.pop %v1278
    %v1281 = vmul.f32 1.0, %v1280
    %v1282 = vrcp.pop %v1279
    %v1283 = vmul.f32 1.0, %v1282
    %v1284 = vtanh.pop %v1270
    %v1285 = vtanh.pop %v1271
    %v1288 = vrot.slane %v1102, 7
    %v1289 = vrot.slane %v1103, 7
    %v1292 = vmul.f32 %v1281, %v1288
    %v1293 = vmul.f32 %v1283, %v1289
    %1296 = vrot.lane.b32.xlu0 %v1284, 32
    %v1297 = vpop.permute.xlu0 %1296
    %1298 = vrot.lane.b32.xlu0 %v1285, 32
    %v1299 = vpop.permute.xlu0 %1298
    %v1302 = vmul.f32 %v1281, %v1297
    %v1303 = vmul.f32 %v1283, %v1299
    %1306 = vrot.lane.b32.xlu0 %v1302, 32
    %v1307 = vpop.permute.xlu0 %1306
    %1308 = vrot.lane.b32.xlu0 %v1303, 32
    %v1309 = vpop.permute.xlu0 %1308
    %v1312 = vadd.f32 %v1292, %v1307
    %v1313 = vadd.f32 %v1293, %v1309
    %v1314 = vtanh.pop %v1312
    %v1315 = vtanh.pop %v1313
    %1318 = vrot.lane.b32.xlu0 %v1314, 32
    %v1319 = vpop.permute.xlu0 %1318
    %1320 = vrot.lane.b32.xlu0 %v1315, 32
    %v1321 = vpop.permute.xlu0 %1320
    %v1324 = vmul.f32 %v1281, %v1319
    %v1325 = vmul.f32 %v1283, %v1321
    %v1328 = vrot.slane %v1324, 5
    %v1329 = vrot.slane %v1325, 4
    %v1330 = vsel %vm281, %v1329, %v1328
    %1331 = vrot.lane.b32.xlu0 %v1330, 64
    %v1332 = vpop.permute.xlu0 %1331
    %v1333 = vsel %vm54, %v1332, 0
    %1335 = vmatprep.subr.mxu0 0.0
    %1336 = vmatpush1.msra.mxu0 0.0
    %1337 = vmatprep.subr.mxu0 0.0
    %1338 = vmatpush1.msra.mxu0 0.0
    %1339 = vmatprep.subr.mxu0 0.0
    %1340 = vmatpush1.msra.mxu0 0.0
    %1341 = vmatprep.subr.mxu0 0.0
    %1342 = vmatpush1.msra.mxu0 0.0
    %1343 = vmatprep.subr.mxu0 0.0
    %1344 = vmatpush1.msra.mxu0 0.0
    %1345 = vmatprep.subr.mxu0 0.0
    %1346 = vmatpush1.msra.mxu0 0.0
    %1347 = vmatprep.subr.mxu0 0.0
    %1348 = vmatpush1.msra.mxu0 0.0
    %1349 = vmatprep.subr.mxu0 0.0
    %1350 = vmatpush1.msra.mxu0 0.0
    %1351 = vmatprep.subr.mxu0 0.0
    %1352 = vmatpush1.msra.mxu0 0.0
    %1353 = vmatprep.subr.mxu0 0.0
    %1354 = vmatpush1.msra.mxu0 0.0
    %1355 = vmatprep.subr.mxu0 0.0
    %1356 = vmatpush1.msra.mxu0 0.0
    %1357 = vmatprep.subr.mxu0 0.0
    %1358 = vmatpush1.msra.mxu0 0.0
    %1359 = vmatprep.subr.mxu0 0.0
    %1360 = vmatpush1.msra.mxu0 %v143
    %1361 = vmatprep.subr.mxu0 0.0
    %1362 = vmatpush1.msra.mxu0 %v142
    %1363 = vmatprep.subr.mxu0 0.0
    %1364 = vmatpush1.msra.mxu0 %v141
    %1365 = vmatprep.subr.mxu0 0.0
    %1366 = vmatpush1.msra.mxu0 %v140
    %1367 = vmatprep.subr.mxu0 0.0
    %1368 = vmatpush2.msra.mxu0 0.0
    %1369 = vmatprep.subr.mxu0 0.0
    %1370 = vmatpush2.msra.mxu0 0.0
    %1371 = vmatprep.subr.mxu0 0.0
    %1372 = vmatpush2.msra.mxu0 0.0
    %1373 = vmatprep.subr.mxu0 0.0
    %1374 = vmatpush2.msra.mxu0 0.0
    %1375 = vmatprep.subr.mxu0 0.0
    %1376 = vmatpush2.msra.mxu0 0.0
    %1377 = vmatprep.subr.mxu0 0.0
    %1378 = vmatpush2.msra.mxu0 0.0
    %1379 = vmatprep.subr.mxu0 0.0
    %1380 = vmatpush2.msra.mxu0 0.0
    %1381 = vmatprep.subr.mxu0 0.0
    %1382 = vmatpush2.msra.mxu0 0.0
    %1383 = vmatprep.subr.mxu0 0.0
    %1384 = vmatpush2.msra.mxu0 0.0
    %1385 = vmatprep.subr.mxu0 0.0
    %1386 = vmatpush2.msra.mxu0 0.0
    %1387 = vmatprep.subr.mxu0 0.0
    %1388 = vmatpush2.msra.mxu0 0.0
    %1389 = vmatprep.subr.mxu0 0.0
    %1390 = vmatpush2.msra.mxu0 0.0
    %1391 = vmatprep.subr.mxu0 0.0
    %1392 = vmatpush2.msra.mxu0 0.0
    %1393 = vmatprep.subr.mxu0 0.0
    %1394 = vmatpush2.msra.mxu0 0.0
    %1395 = vmatprep.subr.mxu0 0.0
    %1396 = vmatpush2.msra.mxu0 0.0
    %1397 = vmatprep.subr.mxu0 0.0
    %1398 = vmatpush2.msra.mxu0 0.0
    %1399 = vmatprep.mubr.f32.mxu0 0.0
    %1400 = vmatmul.mubr.f32.gmra.mxu0 %v1333
    %v1401 = vpop.f32.mrf.mxu0
    %v1402 = vadd.f32 %v276, %v1401
    %v1403 = vpop.f32.mrf.mxu0
    %1404 = vdwg.mxu0
    %1405 = vmatprep.subr.mxu0 0.0
    %1406 = vmatpush1.msra.mxu0 0.0
    %1407 = vmatprep.subr.mxu0 0.0
    %1408 = vmatpush1.msra.mxu0 0.0
    %1409 = vmatprep.subr.mxu0 0.0
    %1410 = vmatpush1.msra.mxu0 0.0
    %1411 = vmatprep.subr.mxu0 0.0
    %1412 = vmatpush1.msra.mxu0 0.0
    %1413 = vmatprep.subr.mxu0 0.0
    %1414 = vmatpush1.msra.mxu0 0.0
    %1415 = vmatprep.subr.mxu0 0.0
    %1416 = vmatpush1.msra.mxu0 0.0
    %1417 = vmatprep.subr.mxu0 0.0
    %1418 = vmatpush1.msra.mxu0 0.0
    %1419 = vmatprep.subr.mxu0 0.0
    %1420 = vmatpush1.msra.mxu0 0.0
    %1421 = vmatprep.subr.mxu0 0.0
    %1422 = vmatpush1.msra.mxu0 0.0
    %1423 = vmatprep.subr.mxu0 0.0
    %1424 = vmatpush1.msra.mxu0 0.0
    %1425 = vmatprep.subr.mxu0 0.0
    %1426 = vmatpush1.msra.mxu0 0.0
    %1427 = vmatprep.subr.mxu0 0.0
    %1428 = vmatpush1.msra.mxu0 0.0
    %1429 = vmatprep.subr.mxu0 0.0
    %1430 = vmatpush1.msra.mxu0 %v139
    %1431 = vmatprep.subr.mxu0 0.0
    %1432 = vmatpush1.msra.mxu0 %v138
    %1433 = vmatprep.subr.mxu0 0.0
    %1434 = vmatpush1.msra.mxu0 %v137
    %1435 = vmatprep.subr.mxu0 0.0
    %1436 = vmatpush1.msra.mxu0 %v136
    %1437 = vmatprep.subr.mxu0 0.0
    %1438 = vmatpush2.msra.mxu0 0.0
    %1439 = vmatprep.subr.mxu0 0.0
    %1440 = vmatpush2.msra.mxu0 0.0
    %1441 = vmatprep.subr.mxu0 0.0
    %1442 = vmatpush2.msra.mxu0 0.0
    %1443 = vmatprep.subr.mxu0 0.0
    %1444 = vmatpush2.msra.mxu0 0.0
    %1445 = vmatprep.subr.mxu0 0.0
    %1446 = vmatpush2.msra.mxu0 0.0
    %1447 = vmatprep.subr.mxu0 0.0
    %1448 = vmatpush2.msra.mxu0 0.0
    %1449 = vmatprep.subr.mxu0 0.0
    %1450 = vmatpush2.msra.mxu0 0.0
    %1451 = vmatprep.subr.mxu0 0.0
    %1452 = vmatpush2.msra.mxu0 0.0
    %1453 = vmatprep.subr.mxu0 0.0
    %1454 = vmatpush2.msra.mxu0 0.0
    %1455 = vmatprep.subr.mxu0 0.0
    %1456 = vmatpush2.msra.mxu0 0.0
    %1457 = vmatprep.subr.mxu0 0.0
    %1458 = vmatpush2.msra.mxu0 0.0
    %1459 = vmatprep.subr.mxu0 0.0
    %1460 = vmatpush2.msra.mxu0 0.0
    %1461 = vmatprep.subr.mxu0 0.0
    %1462 = vmatpush2.msra.mxu0 0.0
    %1463 = vmatprep.subr.mxu0 0.0
    %1464 = vmatpush2.msra.mxu0 0.0
    %1465 = vmatprep.subr.mxu0 0.0
    %1466 = vmatpush2.msra.mxu0 0.0
    %1467 = vmatprep.subr.mxu0 0.0
    %1468 = vmatpush2.msra.mxu0 0.0
    %1469 = vmatprep.mubr.f32.mxu0 0.0
    %1470 = vmatmul.mubr.f32.gmra.mxu0 %v1333
    %v1471 = vpop.f32.mrf.mxu0
    %v1472 = vadd.f32 0.0, %v1471
    %v1473 = vpop.f32.mrf.mxu0
    %1474 = vdwg.mxu0
    %v1476 = vrot.slane %v1472, 2
    %v1477 = vrot.slane %v1472, 3
    %v1480 = vadd.f32 %v128, %v1476
    %v1481 = vadd.f32 %v133, %v1477
    %v1482 = vxor.u32 %v1480, 2147483648
    %v1483 = vxor.u32 %v1481, 2147483648
    %v1484 = vmul.f32 %v1482, 1.442695
    %v1485 = vpow.pop %v1484
    %v1486 = vmul.f32 %v1483, 1.442695
    %v1487 = vpow.pop %v1486
    %v1488 = vadd.f32 %v1485, 1.0
    %v1489 = vadd.f32 %v1487, 1.0
    %v1490 = vrcp.pop %v1488
    %v1491 = vmul.f32 1.0, %v1490
    %v1492 = vrcp.pop %v1489
    %v1493 = vmul.f32 1.0, %v1492
    %v1494 = vtanh.pop %v1480
    %v1495 = vtanh.pop %v1481
    %v1498 = vrot.slane %v1312, 7
    %v1499 = vrot.slane %v1313, 7
    %v1502 = vmul.f32 %v1491, %v1498
    %v1503 = vmul.f32 %v1493, %v1499
    %1506 = vrot.lane.b32.xlu0 %v1494, 32
    %v1507 = vpop.permute.xlu0 %1506
    %1508 = vrot.lane.b32.xlu0 %v1495, 32
    %v1509 = vpop.permute.xlu0 %1508
    %v1512 = vmul.f32 %v1491, %v1507
    %v1513 = vmul.f32 %v1493, %v1509
    %1516 = vrot.lane.b32.xlu0 %v1512, 32
    %v1517 = vpop.permute.xlu0 %1516
    %1518 = vrot.lane.b32.xlu0 %v1513, 32
    %v1519 = vpop.permute.xlu0 %1518
    %v1522 = vadd.f32 %v1502, %v1517
    %v1523 = vadd.f32 %v1503, %v1519
    %v1524 = vtanh.pop %v1522
    %v1525 = vtanh.pop %v1523
    %1528 = vrot.lane.b32.xlu0 %v1524, 32
    %v1529 = vpop.permute.xlu0 %1528
    %1530 = vrot.lane.b32.xlu0 %v1525, 32
    %v1531 = vpop.permute.xlu0 %1530
    %v1534 = vmul.f32 %v1491, %v1529
    %v1535 = vmul.f32 %v1493, %v1531
    %v1538 = vrot.slane %v1534, 6
    %v1539 = vrot.slane %v1535, 5
    %v1540 = vsel %vm281, %v1539, %v1538
    %1541 = vrot.lane.b32.xlu0 %v1540, 64
    %v1542 = vpop.permute.xlu0 %1541
    %v1543 = vsel %vm54, %v1542, 0
    %1545 = vmatprep.subr.mxu0 0.0
    %1546 = vmatpush1.msra.mxu0 0.0
    %1547 = vmatprep.subr.mxu0 0.0
    %1548 = vmatpush1.msra.mxu0 0.0
    %1549 = vmatprep.subr.mxu0 0.0
    %1550 = vmatpush1.msra.mxu0 0.0
    %1551 = vmatprep.subr.mxu0 0.0
    %1552 = vmatpush1.msra.mxu0 0.0
    %1553 = vmatprep.subr.mxu0 0.0
    %1554 = vmatpush1.msra.mxu0 0.0
    %1555 = vmatprep.subr.mxu0 0.0
    %1556 = vmatpush1.msra.mxu0 0.0
    %1557 = vmatprep.subr.mxu0 0.0
    %1558 = vmatpush1.msra.mxu0 0.0
    %1559 = vmatprep.subr.mxu0 0.0
    %1560 = vmatpush1.msra.mxu0 0.0
    %1561 = vmatprep.subr.mxu0 0.0
    %1562 = vmatpush1.msra.mxu0 0.0
    %1563 = vmatprep.subr.mxu0 0.0
    %1564 = vmatpush1.msra.mxu0 0.0
    %1565 = vmatprep.subr.mxu0 0.0
    %1566 = vmatpush1.msra.mxu0 0.0
    %1567 = vmatprep.subr.mxu0 0.0
    %1568 = vmatpush1.msra.mxu0 0.0
    %1569 = vmatprep.subr.mxu0 0.0
    %1570 = vmatpush1.msra.mxu0 %v143
    %1571 = vmatprep.subr.mxu0 0.0
    %1572 = vmatpush1.msra.mxu0 %v142
    %1573 = vmatprep.subr.mxu0 0.0
    %1574 = vmatpush1.msra.mxu0 %v141
    %1575 = vmatprep.subr.mxu0 0.0
    %1576 = vmatpush1.msra.mxu0 %v140
    %1577 = vmatprep.subr.mxu0 0.0
    %1578 = vmatpush2.msra.mxu0 0.0
    %1579 = vmatprep.subr.mxu0 0.0
    %1580 = vmatpush2.msra.mxu0 0.0
    %1581 = vmatprep.subr.mxu0 0.0
    %1582 = vmatpush2.msra.mxu0 0.0
    %1583 = vmatprep.subr.mxu0 0.0
    %1584 = vmatpush2.msra.mxu0 0.0
    %1585 = vmatprep.subr.mxu0 0.0
    %1586 = vmatpush2.msra.mxu0 0.0
    %1587 = vmatprep.subr.mxu0 0.0
    %1588 = vmatpush2.msra.mxu0 0.0
    %1589 = vmatprep.subr.mxu0 0.0
    %1590 = vmatpush2.msra.mxu0 0.0
    %1591 = vmatprep.subr.mxu0 0.0
    %1592 = vmatpush2.msra.mxu0 0.0
    %1593 = vmatprep.subr.mxu0 0.0
    %1594 = vmatpush2.msra.mxu0 0.0
    %1595 = vmatprep.subr.mxu0 0.0
    %1596 = vmatpush2.msra.mxu0 0.0
    %1597 = vmatprep.subr.mxu0 0.0
    %1598 = vmatpush2.msra.mxu0 0.0
    %1599 = vmatprep.subr.mxu0 0.0
    %1600 = vmatpush2.msra.mxu0 0.0
    %1601 = vmatprep.subr.mxu0 0.0
    %1602 = vmatpush2.msra.mxu0 0.0
    %1603 = vmatprep.subr.mxu0 0.0
    %1604 = vmatpush2.msra.mxu0 0.0
    %1605 = vmatprep.subr.mxu0 0.0
    %1606 = vmatpush2.msra.mxu0 0.0
    %1607 = vmatprep.subr.mxu0 0.0
    %1608 = vmatpush2.msra.mxu0 0.0
    %1609 = vmatprep.mubr.f32.mxu0 0.0
    %1610 = vmatmul.mubr.f32.gmra.mxu0 %v1543
    %v1611 = vpop.f32.mrf.mxu0
    %v1612 = vadd.f32 %v276, %v1611
    %v1613 = vpop.f32.mrf.mxu0
    %1614 = vdwg.mxu0
    %1615 = vmatprep.subr.mxu0 0.0
    %1616 = vmatpush1.msra.mxu0 0.0
    %1617 = vmatprep.subr.mxu0 0.0
    %1618 = vmatpush1.msra.mxu0 0.0
    %1619 = vmatprep.subr.mxu0 0.0
    %1620 = vmatpush1.msra.mxu0 0.0
    %1621 = vmatprep.subr.mxu0 0.0
    %1622 = vmatpush1.msra.mxu0 0.0
    %1623 = vmatprep.subr.mxu0 0.0
    %1624 = vmatpush1.msra.mxu0 0.0
    %1625 = vmatprep.subr.mxu0 0.0
    %1626 = vmatpush1.msra.mxu0 0.0
    %1627 = vmatprep.subr.mxu0 0.0
    %1628 = vmatpush1.msra.mxu0 0.0
    %1629 = vmatprep.subr.mxu0 0.0
    %1630 = vmatpush1.msra.mxu0 0.0
    %1631 = vmatprep.subr.mxu0 0.0
    %1632 = vmatpush1.msra.mxu0 0.0
    %1633 = vmatprep.subr.mxu0 0.0
    %1634 = vmatpush1.msra.mxu0 0.0
    %1635 = vmatprep.subr.mxu0 0.0
    %1636 = vmatpush1.msra.mxu0 0.0
    %1637 = vmatprep.subr.mxu0 0.0
    %1638 = vmatpush1.msra.mxu0 0.0
    %1639 = vmatprep.subr.mxu0 0.0
    %1640 = vmatpush1.msra.mxu0 %v139
    %1641 = vmatprep.subr.mxu0 0.0
    %1642 = vmatpush1.msra.mxu0 %v138
    %1643 = vmatprep.subr.mxu0 0.0
    %1644 = vmatpush1.msra.mxu0 %v137
    %1645 = vmatprep.subr.mxu0 0.0
    %1646 = vmatpush1.msra.mxu0 %v136
    %1647 = vmatprep.subr.mxu0 0.0
    %1648 = vmatpush2.msra.mxu0 0.0
    %1649 = vmatprep.subr.mxu0 0.0
    %1650 = vmatpush2.msra.mxu0 0.0
    %1651 = vmatprep.subr.mxu0 0.0
    %1652 = vmatpush2.msra.mxu0 0.0
    %1653 = vmatprep.subr.mxu0 0.0
    %1654 = vmatpush2.msra.mxu0 0.0
    %1655 = vmatprep.subr.mxu0 0.0
    %1656 = vmatpush2.msra.mxu0 0.0
    %1657 = vmatprep.subr.mxu0 0.0
    %1658 = vmatpush2.msra.mxu0 0.0
    %1659 = vmatprep.subr.mxu0 0.0
    %1660 = vmatpush2.msra.mxu0 0.0
    %1661 = vmatprep.subr.mxu0 0.0
    %1662 = vmatpush2.msra.mxu0 0.0
    %1663 = vmatprep.subr.mxu0 0.0
    %1664 = vmatpush2.msra.mxu0 0.0
    %1665 = vmatprep.subr.mxu0 0.0
    %1666 = vmatpush2.msra.mxu0 0.0
    %1667 = vmatprep.subr.mxu0 0.0
    %1668 = vmatpush2.msra.mxu0 0.0
    %1669 = vmatprep.subr.mxu0 0.0
    %1670 = vmatpush2.msra.mxu0 0.0
    %1671 = vmatprep.subr.mxu0 0.0
    %1672 = vmatpush2.msra.mxu0 0.0
    %1673 = vmatprep.subr.mxu0 0.0
    %1674 = vmatpush2.msra.mxu0 0.0
    %1675 = vmatprep.subr.mxu0 0.0
    %1676 = vmatpush2.msra.mxu0 0.0
    %1677 = vmatprep.subr.mxu0 0.0
    %1678 = vmatpush2.msra.mxu0 0.0
    %1679 = vmatprep.mubr.f32.mxu0 0.0
    %1680 = vmatmul.mubr.f32.gmra.mxu0 %v1543
    %v1681 = vpop.f32.mrf.mxu0
    %v1682 = vadd.f32 0.0, %v1681
    %v1683 = vpop.f32.mrf.mxu0
    %1684 = vdwg.mxu0
    %v1686 = vrot.slane %v1682, 1
    %v1687 = vrot.slane %v1682, 2
    %v1690 = vadd.f32 %v128, %v1686
    %v1691 = vadd.f32 %v133, %v1687
    %v1692 = vxor.u32 %v1690, 2147483648
    %v1693 = vxor.u32 %v1691, 2147483648
    %v1694 = vmul.f32 %v1692, 1.442695
    %v1695 = vpow.pop %v1694
    %v1696 = vmul.f32 %v1693, 1.442695
    %v1697 = vpow.pop %v1696
    %v1698 = vadd.f32 %v1695, 1.0
    %v1699 = vadd.f32 %v1697, 1.0
    %v1700 = vrcp.pop %v1698
    %v1701 = vmul.f32 1.0, %v1700
    %v1702 = vrcp.pop %v1699
    %v1703 = vmul.f32 1.0, %v1702
    %v1704 = vtanh.pop %v1690
    %v1705 = vtanh.pop %v1691
    %v1708 = vrot.slane %v1522, 7
    %v1709 = vrot.slane %v1523, 7
    %v1712 = vmul.f32 %v1701, %v1708
    %v1713 = vmul.f32 %v1703, %v1709
    %1716 = vrot.lane.b32.xlu0 %v1704, 32
    %v1717 = vpop.permute.xlu0 %1716
    %1718 = vrot.lane.b32.xlu0 %v1705, 32
    %v1719 = vpop.permute.xlu0 %1718
    %v1722 = vmul.f32 %v1701, %v1717
    %v1723 = vmul.f32 %v1703, %v1719
    %1726 = vrot.lane.b32.xlu0 %v1722, 32
    %v1727 = vpop.permute.xlu0 %1726
    %1728 = vrot.lane.b32.xlu0 %v1723, 32
    %v1729 = vpop.permute.xlu0 %1728
    %v1732 = vadd.f32 %v1712, %v1727
    %v1733 = vadd.f32 %v1713, %v1729
    %v1734 = vtanh.pop %v1732
    %v1735 = vtanh.pop %v1733
    %1738 = vrot.lane.b32.xlu0 %v1734, 32
    %v1739 = vpop.permute.xlu0 %1738
    %1740 = vrot.lane.b32.xlu0 %v1735, 32
    %v1741 = vpop.permute.xlu0 %1740
    %v1744 = vmul.f32 %v1701, %v1739
    %v1745 = vmul.f32 %v1703, %v1741
    %v1748 = vrot.slane %v1744, 7
    %v1749 = vrot.slane %v1745, 6
    %v1750 = vsel %vm281, %v1749, %v1748
    %1751 = vrot.lane.b32.xlu0 %v1750, 64
    %v1752 = vpop.permute.xlu0 %1751
    %v1753 = vsel %vm54, %v1752, 0
    %1755 = vmatprep.subr.mxu0 0.0
    %1756 = vmatpush1.msra.mxu0 0.0
    %1757 = vmatprep.subr.mxu0 0.0
    %1758 = vmatpush1.msra.mxu0 0.0
    %1759 = vmatprep.subr.mxu0 0.0
    %1760 = vmatpush1.msra.mxu0 0.0
    %1761 = vmatprep.subr.mxu0 0.0
    %1762 = vmatpush1.msra.mxu0 0.0
    %1763 = vmatprep.subr.mxu0 0.0
    %1764 = vmatpush1.msra.mxu0 0.0
    %1765 = vmatprep.subr.mxu0 0.0
    %1766 = vmatpush1.msra.mxu0 0.0
    %1767 = vmatprep.subr.mxu0 0.0
    %1768 = vmatpush1.msra.mxu0 0.0
    %1769 = vmatprep.subr.mxu0 0.0
    %1770 = vmatpush1.msra.mxu0 0.0
    %1771 = vmatprep.subr.mxu0 0.0
    %1772 = vmatpush1.msra.mxu0 0.0
    %1773 = vmatprep.subr.mxu0 0.0
    %1774 = vmatpush1.msra.mxu0 0.0
    %1775 = vmatprep.subr.mxu0 0.0
    %1776 = vmatpush1.msra.mxu0 0.0
    %1777 = vmatprep.subr.mxu0 0.0
    %1778 = vmatpush1.msra.mxu0 0.0
    %1779 = vmatprep.subr.mxu0 0.0
    %1780 = vmatpush1.msra.mxu0 %v143
    %1781 = vmatprep.subr.mxu0 0.0
    %1782 = vmatpush1.msra.mxu0 %v142
    %1783 = vmatprep.subr.mxu0 0.0
    %1784 = vmatpush1.msra.mxu0 %v141
    %1785 = vmatprep.subr.mxu0 0.0
    %1786 = vmatpush1.msra.mxu0 %v140
    %1787 = vmatprep.subr.mxu0 0.0
    %1788 = vmatpush2.msra.mxu0 0.0
    %1789 = vmatprep.subr.mxu0 0.0
    %1790 = vmatpush2.msra.mxu0 0.0
    %1791 = vmatprep.subr.mxu0 0.0
    %1792 = vmatpush2.msra.mxu0 0.0
    %1793 = vmatprep.subr.mxu0 0.0
    %1794 = vmatpush2.msra.mxu0 0.0
    %1795 = vmatprep.subr.mxu0 0.0
    %1796 = vmatpush2.msra.mxu0 0.0
    %1797 = vmatprep.subr.mxu0 0.0
    %1798 = vmatpush2.msra.mxu0 0.0
    %1799 = vmatprep.subr.mxu0 0.0
    %1800 = vmatpush2.msra.mxu0 0.0
    %1801 = vmatprep.subr.mxu0 0.0
    %1802 = vmatpush2.msra.mxu0 0.0
    %1803 = vmatprep.subr.mxu0 0.0
    %1804 = vmatpush2.msra.mxu0 0.0
    %1805 = vmatprep.subr.mxu0 0.0
    %1806 = vmatpush2.msra.mxu0 0.0
    %1807 = vmatprep.subr.mxu0 0.0
    %1808 = vmatpush2.msra.mxu0 0.0
    %1809 = vmatprep.subr.mxu0 0.0
    %1810 = vmatpush2.msra.mxu0 0.0
    %1811 = vmatprep.subr.mxu0 0.0
    %1812 = vmatpush2.msra.mxu0 0.0
    %1813 = vmatprep.subr.mxu0 0.0
    %1814 = vmatpush2.msra.mxu0 0.0
    %1815 = vmatprep.subr.mxu0 0.0
    %1816 = vmatpush2.msra.mxu0 0.0
    %1817 = vmatprep.subr.mxu0 0.0
    %1818 = vmatpush2.msra.mxu0 0.0
    %1819 = vmatprep.mubr.f32.mxu0 0.0
    %1820 = vmatmul.mubr.f32.gmra.mxu0 %v1753
    %v1821 = vpop.f32.mrf.mxu0
    %v1822 = vadd.f32 %v276, %v1821
    %v1823 = vpop.f32.mrf.mxu0
    %1824 = vdwg.mxu0
    %1826 = vrot.lane.b32.xlu0 %v562, 16
    %v1827 = vpop.permute.xlu0 %1826
    %1830 = vrot.lane.b32.xlu0 %v772, 32
    %v1831 = vpop.permute.xlu0 %1830
    %1834 = vrot.lane.b32.xlu0 %v982, 48
    %v1835 = vpop.permute.xlu0 %1834
    %1838 = vrot.lane.b32.xlu0 %v1192, 64
    %v1839 = vpop.permute.xlu0 %1838
    %1842 = vrot.lane.b32.xlu0 %v1402, 80
    %v1843 = vpop.permute.xlu0 %1842
    %1846 = vrot.lane.b32.xlu0 %v1612, 96
    %v1847 = vpop.permute.xlu0 %1846
    %1850 = vrot.lane.b32.xlu0 %v1822, 112
    %v1851 = vpop.permute.xlu0 %1850
    %vm1853 = vcmask 130048
    %v1854 = vsel %vm1853, %v354, %v1827
    %v1855 = vsel %vm54, %v1854, %v1831
    %vm1856 = vcmask 392192
    %v1857 = vsel %vm1856, %v1855, %v1835
    %vm1858 = vcmask 523264
    %v1859 = vsel %vm1858, %v1857, %v1839
    %vm1860 = vcmask 654336
    %v1861 = vsel %vm1860, %v1859, %v1843
    %vm1862 = vcmask 785408
    %v1863 = vsel %vm1862, %v1861, %v1847
    %vm1864 = vcmask 916480
    %v1865 = vsel %vm1864, %v1863, %v1851
    %v1866 = vxor.u32 %v1865, 2147483648
    %v1867 = vmul.f32 %v1866, 1.442695
    %v1868 = vpow.pop %v1867
    %v1869 = vadd.f32 %v1868, 1.0
    %v1870 = vrcp.pop %v1869
    %v1871 = vmul.f32 1.0, %v1870
    %1872 = vst [vmem:[#allocation5] sm:$0x3] %v1871
    %v1873 = vrot.slane %v1745, 7
    %1874 = vrot.lane.b32.xlu0 %v1744, 64
    %v1875 = vpop.permute.xlu0 %1874
    %1876 = vrot.lane.b32.xlu0 %v1873, 64
    %v1877 = vpop.permute.xlu0 %1876
    %vm1880 = vcmask 261127
    %1881 = vst.msk [vmem:[#allocation6 - $0x7] sm:$0x80] %vm1880, %v1875
    %vm1882 = vcmask 253952
    %1883 = vst.msk [vmem:[#allocation6 + $0x1] sm:$0x1] %vm1882, %v1877
    // Predicated region
    $region30: #{tpu_custom_call.1} parent=1 // pred_check
      _
    $region31: #{tpu_custom_call.1} parent=1 // pred_check_branch
      %1885 = sbr.rel (0) target = $region33
    $region32: #{tpu_custom_call.1} parent=1 // pred_region
      %s1887 = ssub.s32 32, 32
      %1888 = vsyncadd [#allocation4], %s1887
      %s1890 = sshll.u32 [#allocation5], 4
      %s1891 = int_to_ptr.vmem [resolvable:$true] %s1890
      %1893 = dma.vmem_to_hbm [thread:$0]  %s1891, 32, %s6, [#allocation4]
    $region33: #{tpu_custom_call.1} parent=1 // pred_fallthru
      _
    // Predicated region
    $region34: #{tpu_custom_call.1} parent=1 // pred_check
      _
    $region35: #{tpu_custom_call.1} parent=1 // pred_check_branch
      %1895 = sbr.rel (0) target = $region37
    $region36: #{tpu_custom_call.1} parent=1 // pred_region
      %s1897 = ssub.s32 32, 32
      %1898 = vsyncadd [#allocation7], %s1897
      %s1900 = sshll.u32 [#allocation6], 4
      %s1901 = int_to_ptr.vmem [resolvable:$true] %s1900
      %1903 = dma.vmem_to_hbm [thread:$0]  %s1901, 32, %s7, [#allocation7]
    $region37: #{tpu_custom_call.1} parent=1 // pred_fallthru
      _
    // Predicated region
    $region38: #{tpu_custom_call.1} parent=1 // pred_check
      _
    $region39: #{tpu_custom_call.1} parent=1 // pred_check_branch
      %1905 = sbr.rel (0) target = $region41
    $region40: #{tpu_custom_call.1} parent=1 // pred_region
      %1906 = dma.done [#allocation4], 32
    $region41: #{tpu_custom_call.1} parent=1 // pred_fallthru
      _
    // Predicated region
    $region42: #{tpu_custom_call.1} parent=1 // pred_check
      _
    $region43: #{tpu_custom_call.1} parent=1 // pred_check_branch
      %1908 = sbr.rel (0) target = $region45
    $region44: #{tpu_custom_call.1} parent=1 // pred_region
      %1909 = dma.done [#allocation7], 32
    $region45: #{tpu_custom_call.1} parent=1 // pred_fallthru
      _
    %1910 = vsyncpa [#allocation3], 1
    %1911 = vsyncpa [#allocation4], 1
    %1912 = vsyncpa [#allocation7], 1

</llo_original>
